<compile_context>
chip_gen: v5e
topology: v5e:2x2
jax: 0.10.0
libtpu: 0.0.40
codegen_flags: <defaults>
</compile_context>

<pallas_src>
import math
import functools

import jax
import jax.numpy as jnp
from jax.experimental import pallas as pl
from jax.experimental.pallas import tpu as pltpu


def _round_up(x, m):
    return (x + m - 1) // m * m


def _gmm_loss_kernel(mean_ref, logvar_ref, z_ref, params_ref, seg_ref,
                     consts_ref, out_ref, *, num_classes, zdim, pack,
                     tile_rows, true_batch, reduction):
    """One grid step over `tile_rows` packed rows (= tile_rows * pack batch rows).

    mean/logvar/z : (tile_rows, W) with W = pack * zdim (pack batch rows per
                    packed row -> all 128 lanes used when zdim < 128).
    params        : (3K, W) rows = [u | 1/lambda | 1/(2*lambda)], each tiled
                    `pack` times along the feature axis.
    seg           : (W, pack) 0/1 block-diagonal matrix; dot(x, seg) is the
                    per-batch-row sum over zdim, computed on the MXU.
    consts        : (3K, pack) per-class scalars broadcast along lanes:
                    rows = [D*log w - 0.5*sum log(2*pi*lambda) |
                            sum log lambda | log w].
    out           : (tile_rows, pack) per-row loss ('none') or (1, 1, 1)
                    per-tile partial sum ('mean'/'sum').
    """
    K = num_classes
    f32 = jnp.float32
    dot = functools.partial(jnp.dot, precision=jax.lax.Precision.HIGHEST,
                            preferred_element_type=f32)

    mean = mean_ref[...].astype(f32)
    logvar = logvar_ref[...].astype(f32)
    z = z_ref[...].astype(f32)
    exp_logvar = jnp.exp(logvar)

    params = params_ref[...]          # (3K, W) f32
    seg = seg_ref[...]                # (W, P)  f32 0/1
    consts = consts_ref[...]          # (3K, P) f32

    # -0.5 * sum_d (logvar + 1)
    loss = -0.5 * (dot(logvar, seg) + float(zdim))

    logits = []
    d_sums = []
    for k in range(K):
        u_k = params[k:k + 1, :]
        inv_lam_k = params[K + k:K + k + 1, :]
        inv_2lam_k = params[2 * K + k:2 * K + k + 1, :]

        dz = z - u_k
        dm = mean - u_k
        # log p(z|c_k) + D*log w_k  (reference: sum_d (a - b / (2*lambda)))
        logits.append(consts[k:k + 1, :] - dot(dz * dz * inv_2lam_k, seg))
        # sum_d [log lambda + exp(logvar)/lambda + (mean-u)^2/lambda]
        d_sums.append(consts[K + k:K + k + 1, :]
                      + dot((exp_logvar + dm * dm) * inv_lam_k, seg))

    # Responsibilities via log-sum-exp (stable; log(gamma) computed analytically).
    m = logits[0]
    for k in range(1, K):
        m = jnp.maximum(m, logits[k])
    es = [jnp.exp(l - m) for l in logits]
    denom = es[0]
    for k in range(1, K):
        denom = denom + es[k]
    log_denom = jnp.log(denom)
    inv_denom = 1.0 / denom

    for k in range(K):
        gamma_k = es[k] * inv_denom
        log_gamma_k = logits[k] - m - log_denom
        log_w_k = consts[2 * K + k:2 * K + k + 1, :]
        loss = loss + gamma_k * (0.5 * d_sums[k] - log_w_k + log_gamma_k)

    if reduction == 'none':
        out_ref[...] = loss
    else:
        # Per-tile partial sum; padded rows are masked so the wrapper can
        # finish with the true batch size.  Each tile owns its own output
        # block -> the grid axis stays "parallel" (megacore-friendly on v7x).
        r = jax.lax.broadcasted_iota(jnp.int32, (tile_rows, pack), 0)
        c = jax.lax.broadcasted_iota(jnp.int32, (tile_rows, pack), 1)
        row = (pl.program_id(0) * tile_rows + r) * pack + c
        masked = jnp.where(row < true_batch, loss, 0.0)
        out_ref[...] = jnp.sum(masked).reshape(1, 1, 1)


def gmm_loss(mean, logvar, z_tilde, theta_p, u_p, lambda_p, reduction='mean'):
    """Pallas TPU implementation of GMMLoss.forward."""
    if reduction not in ('mean', 'sum', 'none'):
        raise NotImplementedError(reduction)

    B, D = mean.shape
    K = u_p.shape[0]

    theta_p = theta_p.astype(jnp.float32)
    u_p = u_p.astype(jnp.float32)
    lambda_p = lambda_p.astype(jnp.float32)

    # ---- lane packing: P batch rows side-by-side on the 128 lanes -----------
    P = max(1, 128 // D)
    W = P * D
    Bp = -(-B // P)                               # packed rows with real data

    # ~2048 batch rows per grid step, capped so the 3 double-buffered (TBp, W)
    # f32 input tiles stay far inside even v7x's smaller VMEM.
    budget_rows = (8 * 1024 * 1024) // (3 * 2 * W * 4)
    tbp_target = max(8, (min(2048 // P, budget_rows) // 8) * 8)
    TBp = min(tbp_target, _round_up(Bp, 8))       # multiple of 8
    Bp_pad = _round_up(Bp, TBp)
    B_pad = Bp_pad * P
    grid = Bp_pad // TBp

    def _pack(x):
        # Keep the input dtype (bf16 stays bf16 in HBM, upcast in-kernel).
        if B_pad != B:
            x = jnp.pad(x, ((0, B_pad - B), (0, 0)))
        return x.reshape(Bp_pad, W)               # contiguous -> free reshape

    mean_p, logvar_p, z_p = _pack(mean), _pack(logvar), _pack(z_tilde)

    # ---- per-class constants: no divides / log(lambda) inside the kernel ----
    log_w = jnp.log(theta_p)                                             # (K,)
    inv_lam = 1.0 / lambda_p                                             # (K,D)
    logit_const = D * log_w - 0.5 * jnp.sum(
        jnp.log(2.0 * math.pi * lambda_p), axis=1)                       # (K,)
    loglam_sum = jnp.sum(jnp.log(lambda_p), axis=1)                      # (K,)

    cls_params = jnp.tile(
        jnp.concatenate([u_p, inv_lam, 0.5 * inv_lam], axis=0), (1, P))  # (3K, W)
    consts = jnp.tile(
        jnp.concatenate([logit_const, loglam_sum, log_w])[:, None], (1, P))  # (3K, P)
    seg = (jnp.arange(W)[:, None] // D
           == jnp.arange(P)[None, :]).astype(jnp.float32)                # (W, P)

    if reduction == 'none':
        out_shape = jax.ShapeDtypeStruct((Bp_pad, P), jnp.float32)
        out_specs = pl.BlockSpec((TBp, P), lambda i: (i, 0))
    else:
        out_shape = jax.ShapeDtypeStruct((grid, 1, 1), jnp.float32)
        out_specs = pl.BlockSpec((1, 1, 1), lambda i: (i, 0, 0))

    kernel = functools.partial(
        _gmm_loss_kernel, num_classes=K, zdim=D, pack=P, tile_rows=TBp,
        true_batch=B, reduction=reduction)

    data_spec = pl.BlockSpec((TBp, W), lambda i: (i, 0))
    out = pl.pallas_call(
        kernel,
        out_shape=out_shape,
        grid_spec=pltpu.PrefetchScalarGridSpec(
            num_scalar_prefetch=0,
            grid=(grid,),
            in_specs=[
                data_spec,                                   # mean   (packed)
                data_spec,                                   # logvar (packed)
                data_spec,                                   # z      (packed)
                pl.BlockSpec((3 * K, W), lambda i: (0, 0)),  # u, 1/lam, 1/(2 lam)
                pl.BlockSpec((W, P), lambda i: (0, 0)),      # segment-sum matrix
                pl.BlockSpec((3 * K, P), lambda i: (0, 0)),  # per-class scalars
            ],
            out_specs=out_specs,
        ),
        compiler_params=pltpu.CompilerParams(
            dimension_semantics=("parallel",),
            vmem_limit_bytes=32 * 1024 * 1024,
        ),
    )(mean_p, logvar_p, z_p, cls_params, seg, consts)

    if reduction == 'none':
        return out.reshape(-1)[:B]
    total = jnp.sum(out)                      # combine per-tile partial sums
    return total / B if reduction == 'mean' else total


def gmm_loss_ref(mean, logvar, z_tilde, theta_p, u_p, lambda_p,
                 reduction='mean'):
    """Pure-JAX reference mirroring the PyTorch forward exactly."""
    weight = theta_p
    z_mean_t = mean[:, None, :]
    z_log_var_t = logvar[:, None, :]
    Z = z_tilde[:, None, :]
    a = jnp.log(weight)[:, None] - 0.5 * jnp.log(2 * math.pi * lambda_p)
    b = (Z - u_p) ** 2
    c = 2 * lambda_p
    p_c_z = jnp.exp(jnp.sum(a - b / c, axis=2)) + 1e-10
    gamma = p_c_z / jnp.sum(p_c_z, axis=-1, keepdims=True)
    gamma_t = gamma[:, :, None]
    g = jnp.exp(z_log_var_t) / lambda_p
    h = (z_mean_t - u_p) ** 2 / lambda_p
    d = jnp.log(lambda_p) + g + h
    loss = jnp.sum(0.5 * gamma_t * d, axis=(1, 2))
    loss = loss - 0.5 * jnp.sum(logvar + 1, axis=-1)
    loss = (loss - jnp.sum(jnp.log(weight) * gamma, axis=-1)
            + jnp.sum(jnp.log(gamma) * gamma, axis=-1))
    if reduction == 'mean':
        return jnp.mean(loss)
    if reduction == 'sum':
        return jnp.sum(loss)
    return loss


if __name__ == "__main__":
    num_classes = 3      # fixed by theta_p = [4.5, 1/5, 1/5] in the module
    zdim = 32
    batch = 8

    # Deterministic parameter init (exactly as in GMMLoss.__init__).
    theta_p = jnp.array([4.5, 1.0 / 5.0, 1.0 / 5.0], dtype=jnp.float32)
    u_p = jnp.zeros((num_classes, zdim), dtype=jnp.float32)
    lambda_p = jnp.ones((num_classes, zdim), dtype=jnp.float32)

    key = jax.random.PRNGKey(0)
    k1, k2, k3 = jax.random.split(key, 3)
    mean = jax.random.normal(k1, (batch, zdim), dtype=jnp.float32)
    logvar = 0.1 * jax.random.normal(k2, (batch, zdim), dtype=jnp.float32)
    z_tilde = jax.random.normal(k3, (batch, zdim), dtype=jnp.float32)

    fn = jax.jit(gmm_loss, static_argnames=('reduction',))

    for red in ('mean', 'sum', 'none'):
        out = jax.block_until_ready(
            fn(mean, logvar, z_tilde, theta_p, u_p, lambda_p, reduction=red))
        ref = jax.block_until_ready(
            gmm_loss_ref(mean, logvar, z_tilde, theta_p, u_p, lambda_p,
                         reduction=red))
        assert jnp.allclose(out, ref, rtol=1e-5, atol=1e-5), (red, out, ref)

    # Multi-tile path: grid > 1, batch not a multiple of the tile, non-trivial
    # GMM params (exercises padding, masking and the parallel partial sums).
    big_b = 2500
    kb = jax.random.split(jax.random.PRNGKey(1), 5)
    mean_b = jax.random.normal(kb[0], (big_b, zdim), dtype=jnp.float32)
    logvar_b = 0.1 * jax.random.normal(kb[1], (big_b, zdim), dtype=jnp.float32)
    z_b = jax.random.normal(kb[2], (big_b, zdim), dtype=jnp.float32)
    u_b = 0.05 * jax.random.normal(kb[3], (num_classes, zdim), dtype=jnp.float32)
    lam_b = jnp.exp(0.1 * jax.random.normal(kb[4], (num_classes, zdim),
                                            dtype=jnp.float32))
    out = jax.block_until_ready(
        fn(mean_b, logvar_b, z_b, theta_p, u_b, lam_b, reduction='mean'))
    ref = jax.block_until_ready(
        gmm_loss_ref(mean_b, logvar_b, z_b, theta_p, u_b, lam_b,
                     reduction='mean'))
    assert jnp.allclose(out, ref, rtol=1e-5, atol=1e-4), (out, ref)

    print("KERNEL_OK")
</pallas_src>

<mosaic_0001>
module attributes {stable_mosaic.version = 11 : i64} {
  func.func @_gmm_loss_kernel(%arg0: i32, %arg1: memref<8x128xf32, #tpu.memory_space<vmem>>, %arg2: memref<8x128xf32, #tpu.memory_space<vmem>>, %arg3: memref<8x128xf32, #tpu.memory_space<vmem>>, %arg4: memref<9x128xf32, #tpu.memory_space<vmem>>, %arg5: memref<128x4xf32, #tpu.memory_space<vmem>>, %arg6: memref<9x4xf32, #tpu.memory_space<vmem>>, %arg7: memref<1x1x1xf32, #tpu.memory_space<vmem>>) attributes {dimension_semantics = [#tpu.dimension_semantics<parallel>], iteration_bounds = array<i64: 1>, scalar_prefetch = 0 : i64, scratch_operands = 0 : i64, tpu.core_type = #tpu.core_type<tc>, window_params = [{transform_indices = @transform_0, window_bounds = array<i64: 8, 128>}, {transform_indices = @transform_1, window_bounds = array<i64: 8, 128>}, {transform_indices = @transform_2, window_bounds = array<i64: 8, 128>}, {pipeline_mode = #tpu.pipeline_mode<synchronous>, transform_indices = @transform_3, window_bounds = array<i64: 9, 128>}, {pipeline_mode = #tpu.pipeline_mode<synchronous>, transform_indices = @transform_4, window_bounds = array<i64: 128, 4>}, {pipeline_mode = #tpu.pipeline_mode<synchronous>, transform_indices = @transform_5, window_bounds = array<i64: 9, 4>}, {transform_indices = @transform_6, window_bounds = array<i64: 1, 1, 1>}]} {
    %c0 = arith.constant 0 : index
    %c0_0 = arith.constant 0 : index
    %0 = vector.load %arg1[%c0, %c0_0] : memref<8x128xf32, #tpu.memory_space<vmem>>, vector<8x128xf32>
    %c0_1 = arith.constant 0 : index
    %c0_2 = arith.constant 0 : index
    %1 = vector.load %arg2[%c0_1, %c0_2] : memref<8x128xf32, #tpu.memory_space<vmem>>, vector<8x128xf32>
    %c0_3 = arith.constant 0 : index
    %c0_4 = arith.constant 0 : index
    %2 = vector.load %arg3[%c0_3, %c0_4] : memref<8x128xf32, #tpu.memory_space<vmem>>, vector<8x128xf32>
    %3 = math.exp %1 : vector<8x128xf32>
    %c0_5 = arith.constant 0 : index
    %c0_6 = arith.constant 0 : index
    %4 = vector.load %arg4[%c0_5, %c0_6] : memref<9x128xf32, #tpu.memory_space<vmem>>, vector<9x128xf32>
    %c0_7 = arith.constant 0 : index
    %c0_8 = arith.constant 0 : index
    %5 = vector.load %arg5[%c0_7, %c0_8] : memref<128x4xf32, #tpu.memory_space<vmem>>, vector<128x4xf32>
    %c0_9 = arith.constant 0 : index
    %c0_10 = arith.constant 0 : index
    %6 = vector.load %arg6[%c0_9, %c0_10] : memref<9x4xf32, #tpu.memory_space<vmem>>, vector<9x4xf32>
    %cst = arith.constant dense<0.000000e+00> : vector<8x4xf32>
    %7 = tpu.matmul %1, %5, %cst {dimension_numbers = #tpu.dot_dimension_numbers<[1], [0], [0], [1], [0, 0, 1, 1], [], []>, precision = #tpu.contract_precision<fp32>} : vector<8x128xf32>, vector<128x4xf32>, vector<8x4xf32> -> vector<8x4xf32>
    %cst_11 = arith.constant 3.200000e+01 : f32
    %8 = vector.broadcast %cst_11 : f32 to vector<8x4xf32>
    %9 = arith.addf %7, %8 : vector<8x4xf32>
    %cst_12 = arith.constant -5.000000e-01 : f32
    %10 = vector.broadcast %cst_12 : f32 to vector<8x4xf32>
    %11 = arith.mulf %10, %9 : vector<8x4xf32>
    %12 = vector.extract_strided_slice %4 {offsets = [0, 0], sizes = [1, 128], strides = [1, 1]} : vector<9x128xf32> to vector<1x128xf32>
    %13 = vector.extract_strided_slice %4 {offsets = [3, 0], sizes = [1, 128], strides = [1, 1]} : vector<9x128xf32> to vector<1x128xf32>
    %14 = vector.extract_strided_slice %4 {offsets = [6, 0], sizes = [1, 128], strides = [1, 1]} : vector<9x128xf32> to vector<1x128xf32>
    %15 = vector.broadcast %12 : vector<1x128xf32> to vector<8x128xf32>
    %16 = arith.subf %2, %15 : vector<8x128xf32>
    %17 = vector.broadcast %12 : vector<1x128xf32> to vector<8x128xf32>
    %18 = arith.subf %0, %17 : vector<8x128xf32>
    %19 = vector.extract_strided_slice %6 {offsets = [0, 0], sizes = [1, 4], strides = [1, 1]} : vector<9x4xf32> to vector<1x4xf32>
    %20 = arith.mulf %16, %16 : vector<8x128xf32>
    %21 = vector.broadcast %14 : vector<1x128xf32> to vector<8x128xf32>
    %22 = arith.mulf %20, %21 : vector<8x128xf32>
    %cst_13 = arith.constant dense<0.000000e+00> : vector<8x4xf32>
    %23 = tpu.matmul %22, %5, %cst_13 {dimension_numbers = #tpu.dot_dimension_numbers<[1], [0], [0], [1], [0, 0, 1, 1], [], []>, precision = #tpu.contract_precision<fp32>} : vector<8x128xf32>, vector<128x4xf32>, vector<8x4xf32> -> vector<8x4xf32>
    %24 = vector.broadcast %19 : vector<1x4xf32> to vector<8x4xf32>
    %25 = arith.subf %24, %23 : vector<8x4xf32>
    %26 = vector.extract_strided_slice %6 {offsets = [3, 0], sizes = [1, 4], strides = [1, 1]} : vector<9x4xf32> to vector<1x4xf32>
    %27 = arith.mulf %18, %18 : vector<8x128xf32>
    %28 = arith.addf %3, %27 : vector<8x128xf32>
    %29 = vector.broadcast %13 : vector<1x128xf32> to vector<8x128xf32>
    %30 = arith.mulf %28, %29 : vector<8x128xf32>
    %cst_14 = arith.constant dense<0.000000e+00> : vector<8x4xf32>
    %31 = tpu.matmul %30, %5, %cst_14 {dimension_numbers = #tpu.dot_dimension_numbers<[1], [0], [0], [1], [0, 0, 1, 1], [], []>, precision = #tpu.contract_precision<fp32>} : vector<8x128xf32>, vector<128x4xf32>, vector<8x4xf32> -> vector<8x4xf32>
    %32 = vector.broadcast %26 : vector<1x4xf32> to vector<8x4xf32>
    %33 = arith.addf %32, %31 : vector<8x4xf32>
    %34 = vector.extract_strided_slice %4 {offsets = [1, 0], sizes = [1, 128], strides = [1, 1]} : vector<9x128xf32> to vector<1x128xf32>
    %35 = vector.extract_strided_slice %4 {offsets = [4, 0], sizes = [1, 128], strides = [1, 1]} : vector<9x128xf32> to vector<1x128xf32>
    %36 = vector.extract_strided_slice %4 {offsets = [7, 0], sizes = [1, 128], strides = [1, 1]} : vector<9x128xf32> to vector<1x128xf32>
    %37 = vector.broadcast %34 : vector<1x128xf32> to vector<8x128xf32>
    %38 = arith.subf %2, %37 : vector<8x128xf32>
    %39 = vector.broadcast %34 : vector<1x128xf32> to vector<8x128xf32>
    %40 = arith.subf %0, %39 : vector<8x128xf32>
    %41 = vector.extract_strided_slice %6 {offsets = [1, 0], sizes = [1, 4], strides = [1, 1]} : vector<9x4xf32> to vector<1x4xf32>
    %42 = arith.mulf %38, %38 : vector<8x128xf32>
    %43 = vector.broadcast %36 : vector<1x128xf32> to vector<8x128xf32>
    %44 = arith.mulf %42, %43 : vector<8x128xf32>
    %cst_15 = arith.constant dense<0.000000e+00> : vector<8x4xf32>
    %45 = tpu.matmul %44, %5, %cst_15 {dimension_numbers = #tpu.dot_dimension_numbers<[1], [0], [0], [1], [0, 0, 1, 1], [], []>, precision = #tpu.contract_precision<fp32>} : vector<8x128xf32>, vector<128x4xf32>, vector<8x4xf32> -> vector<8x4xf32>
    %46 = vector.broadcast %41 : vector<1x4xf32> to vector<8x4xf32>
    %47 = arith.subf %46, %45 : vector<8x4xf32>
    %48 = vector.extract_strided_slice %6 {offsets = [4, 0], sizes = [1, 4], strides = [1, 1]} : vector<9x4xf32> to vector<1x4xf32>
    %49 = arith.mulf %40, %40 : vector<8x128xf32>
    %50 = arith.addf %3, %49 : vector<8x128xf32>
    %51 = vector.broadcast %35 : vector<1x128xf32> to vector<8x128xf32>
    %52 = arith.mulf %50, %51 : vector<8x128xf32>
    %cst_16 = arith.constant dense<0.000000e+00> : vector<8x4xf32>
    %53 = tpu.matmul %52, %5, %cst_16 {dimension_numbers = #tpu.dot_dimension_numbers<[1], [0], [0], [1], [0, 0, 1, 1], [], []>, precision = #tpu.contract_precision<fp32>} : vector<8x128xf32>, vector<128x4xf32>, vector<8x4xf32> -> vector<8x4xf32>
    %54 = vector.broadcast %48 : vector<1x4xf32> to vector<8x4xf32>
    %55 = arith.addf %54, %53 : vector<8x4xf32>
    %56 = vector.extract_strided_slice %4 {offsets = [2, 0], sizes = [1, 128], strides = [1, 1]} : vector<9x128xf32> to vector<1x128xf32>
    %57 = vector.extract_strided_slice %4 {offsets = [5, 0], sizes = [1, 128], strides = [1, 1]} : vector<9x128xf32> to vector<1x128xf32>
    %58 = vector.extract_strided_slice %4 {offsets = [8, 0], sizes = [1, 128], strides = [1, 1]} : vector<9x128xf32> to vector<1x128xf32>
    %59 = vector.broadcast %56 : vector<1x128xf32> to vector<8x128xf32>
    %60 = arith.subf %2, %59 : vector<8x128xf32>
    %61 = vector.broadcast %56 : vector<1x128xf32> to vector<8x128xf32>
    %62 = arith.subf %0, %61 : vector<8x128xf32>
    %63 = vector.extract_strided_slice %6 {offsets = [2, 0], sizes = [1, 4], strides = [1, 1]} : vector<9x4xf32> to vector<1x4xf32>
    %64 = arith.mulf %60, %60 : vector<8x128xf32>
    %65 = vector.broadcast %58 : vector<1x128xf32> to vector<8x128xf32>
    %66 = arith.mulf %64, %65 : vector<8x128xf32>
    %cst_17 = arith.constant dense<0.000000e+00> : vector<8x4xf32>
    %67 = tpu.matmul %66, %5, %cst_17 {dimension_numbers = #tpu.dot_dimension_numbers<[1], [0], [0], [1], [0, 0, 1, 1], [], []>, precision = #tpu.contract_precision<fp32>} : vector<8x128xf32>, vector<128x4xf32>, vector<8x4xf32> -> vector<8x4xf32>
    %68 = vector.broadcast %63 : vector<1x4xf32> to vector<8x4xf32>
    %69 = arith.subf %68, %67 : vector<8x4xf32>
    %70 = vector.extract_strided_slice %6 {offsets = [5, 0], sizes = [1, 4], strides = [1, 1]} : vector<9x4xf32> to vector<1x4xf32>
    %71 = arith.mulf %62, %62 : vector<8x128xf32>
    %72 = arith.addf %3, %71 : vector<8x128xf32>
    %73 = vector.broadcast %57 : vector<1x128xf32> to vector<8x128xf32>
    %74 = arith.mulf %72, %73 : vector<8x128xf32>
    %cst_18 = arith.constant dense<0.000000e+00> : vector<8x4xf32>
    %75 = tpu.matmul %74, %5, %cst_18 {dimension_numbers = #tpu.dot_dimension_numbers<[1], [0], [0], [1], [0, 0, 1, 1], [], []>, precision = #tpu.contract_precision<fp32>} : vector<8x128xf32>, vector<128x4xf32>, vector<8x4xf32> -> vector<8x4xf32>
    %76 = vector.broadcast %70 : vector<1x4xf32> to vector<8x4xf32>
    %77 = arith.addf %76, %75 : vector<8x4xf32>
    %78 = arith.maximumf %25, %47 : vector<8x4xf32>
    %79 = arith.maximumf %78, %69 : vector<8x4xf32>
    %80 = arith.subf %25, %79 : vector<8x4xf32>
    %81 = math.exp %80 : vector<8x4xf32>
    %82 = arith.subf %47, %79 : vector<8x4xf32>
    %83 = math.exp %82 : vector<8x4xf32>
    %84 = arith.subf %69, %79 : vector<8x4xf32>
    %85 = math.exp %84 : vector<8x4xf32>
    %86 = arith.addf %81, %83 : vector<8x4xf32>
    %87 = arith.addf %86, %85 : vector<8x4xf32>
    %88 = math.log %87 : vector<8x4xf32>
    %cst_19 = arith.constant 1.000000e+00 : f32
    %89 = vector.broadcast %cst_19 : f32 to vector<8x4xf32>
    %90 = arith.divf %89, %87 : vector<8x4xf32>
    %91 = arith.mulf %81, %90 : vector<8x4xf32>
    %92 = arith.subf %25, %79 : vector<8x4xf32>
    %93 = arith.subf %92, %88 : vector<8x4xf32>
    %94 = vector.extract_strided_slice %6 {offsets = [6, 0], sizes = [1, 4], strides = [1, 1]} : vector<9x4xf32> to vector<1x4xf32>
    %cst_20 = arith.constant 5.000000e-01 : f32
    %95 = vector.broadcast %cst_20 : f32 to vector<8x4xf32>
    %96 = arith.mulf %95, %33 : vector<8x4xf32>
    %97 = vector.broadcast %94 : vector<1x4xf32> to vector<8x4xf32>
    %98 = arith.subf %96, %97 : vector<8x4xf32>
    %99 = arith.addf %98, %93 : vector<8x4xf32>
    %100 = arith.mulf %91, %99 : vector<8x4xf32>
    %101 = arith.addf %11, %100 : vector<8x4xf32>
    %102 = arith.mulf %83, %90 : vector<8x4xf32>
    %103 = arith.subf %47, %79 : vector<8x4xf32>
    %104 = arith.subf %103, %88 : vector<8x4xf32>
    %105 = vector.extract_strided_slice %6 {offsets = [7, 0], sizes = [1, 4], strides = [1, 1]} : vector<9x4xf32> to vector<1x4xf32>
    %cst_21 = arith.constant 5.000000e-01 : f32
    %106 = vector.broadcast %cst_21 : f32 to vector<8x4xf32>
    %107 = arith.mulf %106, %55 : vector<8x4xf32>
    %108 = vector.broadcast %105 : vector<1x4xf32> to vector<8x4xf32>
    %109 = arith.subf %107, %108 : vector<8x4xf32>
    %110 = arith.addf %109, %104 : vector<8x4xf32>
    %111 = arith.mulf %102, %110 : vector<8x4xf32>
    %112 = arith.addf %101, %111 : vector<8x4xf32>
    %113 = arith.mulf %85, %90 : vector<8x4xf32>
    %114 = arith.subf %69, %79 : vector<8x4xf32>
    %115 = arith.subf %114, %88 : vector<8x4xf32>
    %116 = vector.extract_strided_slice %6 {offsets = [8, 0], sizes = [1, 4], strides = [1, 1]} : vector<9x4xf32> to vector<1x4xf32>
    %cst_22 = arith.constant 5.000000e-01 : f32
    %117 = vector.broadcast %cst_22 : f32 to vector<8x4xf32>
    %118 = arith.mulf %117, %77 : vector<8x4xf32>
    %119 = vector.broadcast %116 : vector<1x4xf32> to vector<8x4xf32>
    %120 = arith.subf %118, %119 : vector<8x4xf32>
    %121 = arith.addf %120, %115 : vector<8x4xf32>
    %122 = arith.mulf %113, %121 : vector<8x4xf32>
    %123 = arith.addf %112, %122 : vector<8x4xf32>
    %124 = tpu.iota {dimensions = array<i32: 0>} : vector<8x4xi32>
    %125 = tpu.iota {dimensions = array<i32: 1>} : vector<8x4xi32>
    %c8_i32 = arith.constant 8 : i32
    %126 = arith.muli %arg0, %c8_i32 : i32
    %127 = vector.broadcast %126 : i32 to vector<8x4xi32>
    %128 = arith.addi %127, %124 : vector<8x4xi32>
    %c4_i32 = arith.constant 4 : i32
    %129 = vector.broadcast %c4_i32 : i32 to vector<8x4xi32>
    %130 = arith.muli %128, %129 : vector<8x4xi32>
    %131 = arith.addi %130, %125 : vector<8x4xi32>
    %c8_i32_23 = arith.constant 8 : i32
    %132 = vector.broadcast %c8_i32_23 : i32 to vector<8x4xi32>
    %133 = arith.cmpi slt, %131, %132 : vector<8x4xi32>
    %cst_24 = arith.constant 0.000000e+00 : f32
    %134 = vector.broadcast %cst_24 : f32 to vector<8x4xf32>
    %135 = arith.select %133, %123, %134 : vector<8x4xi1>, vector<8x4xf32>
    %136 = vector.shape_cast %135 : vector<8x4xf32> to vector<1x8x4xf32>
    %cst_25 = arith.constant dense<0.000000e+00> : vector<1xf32>
    %137 = vector.multi_reduction <add>, %136, %cst_25 [1, 2] : vector<1x8x4xf32> to vector<1xf32>
    %138 = vector.shape_cast %137 : vector<1xf32> to vector<1x1x1xf32>
    %139 = vector.extract %138[0, 0, 0] : f32 from vector<1x1x1xf32>
    %140 = vector.broadcast %139 : f32 to vector<1x1x1xf32>
    %c0_26 = arith.constant 0 : index
    %c0_27 = arith.constant 0 : index
    %c0_28 = arith.constant 0 : index
    %141 = vector.load %arg7[%c0_26, %c0_27, %c0_28] : memref<1x1x1xf32, #tpu.memory_space<vmem>>, vector<1x1x1xf32>
    tpu.vector_store %arg7[%c0_26, %c0_27, %c0_28], %140 {strides = array<i32>} : memref<1x1x1xf32, #tpu.memory_space<vmem>>, vector<1x1x1xf32>,
    return
  }
  func.func @transform_0(%arg0: i32) -> (i32, i32) {
    %c0_i32 = arith.constant 0 : i32
    %c0_i32_0 = arith.constant 0 : i32
    return %arg0, %c0_i32 : i32, i32
  }
  func.func @transform_1(%arg0: i32) -> (i32, i32) {
    %c0_i32 = arith.constant 0 : i32
    %c0_i32_0 = arith.constant 0 : i32
    return %arg0, %c0_i32 : i32, i32
  }
  func.func @transform_2(%arg0: i32) -> (i32, i32) {
    %c0_i32 = arith.constant 0 : i32
    %c0_i32_0 = arith.constant 0 : i32
    return %arg0, %c0_i32 : i32, i32
  }
  func.func @transform_3(%arg0: i32) -> (i32, i32) {
    %c0_i32 = arith.constant 0 : i32
    %c0_i32_0 = arith.constant 0 : i32
    %c0_i32_1 = arith.constant 0 : i32
    return %c0_i32, %c0_i32_0 : i32, i32
  }
  func.func @transform_4(%arg0: i32) -> (i32, i32) {
    %c0_i32 = arith.constant 0 : i32
    %c0_i32_0 = arith.constant 0 : i32
    %c0_i32_1 = arith.constant 0 : i32
    return %c0_i32, %c0_i32_0 : i32, i32
  }
  func.func @transform_5(%arg0: i32) -> (i32, i32) {
    %c0_i32 = arith.constant 0 : i32
    %c0_i32_0 = arith.constant 0 : i32
    %c0_i32_1 = arith.constant 0 : i32
    return %c0_i32, %c0_i32_0 : i32, i32
  }
  func.func @transform_6(%arg0: i32) -> (i32, i32, i32) {
    %c0_i32 = arith.constant 0 : i32
    %c0_i32_0 = arith.constant 0 : i32
    %c0_i32_1 = arith.constant 0 : i32
    return %arg0, %c0_i32, %c0_i32_0 : i32, i32, i32
  }
}

</mosaic_0001>

<llo_original>
// kernel: tile.13
$region0: #{tile.13}
  %s0 = inlined_call_operand.vmem [shape: f32[9,4,32], index: 0, kind: input, shape index: {}]
  %s1 = inlined_call_operand.vmem [shape: f32[9,128], index: 1, kind: output, shape index: {}]
  $region1: #{tile.13} parent=0
    #allocation0 [shape = 'u8[36864]{0}', space=vmem, size = 0x9000, scoped, tag = 'scoped mem for input reshape']
    %s3 = ssub.s32 16, 1
    %s4 = scalar_lea.vmem %s0, 32
    %v5 = vld [vmem:[%s4] sm:%s3]
    %s6 = scalar_lea.vmem [#allocation0], 64
    %7 = vst [vmem:[%s6] sm:%s3] %v5
    %s8 = scalar_lea.vmem %s0, 28
    %v9 = vld [vmem:[%s8] sm:%s3]
    %s10 = scalar_lea.vmem [#allocation0], 56
    %11 = vst [vmem:[%s10] sm:%s3] %v9
    %s12 = scalar_lea.vmem %s0, 24
    %v13 = vld [vmem:[%s12] sm:%s3]
    %s14 = scalar_lea.vmem [#allocation0], 48
    %15 = vst [vmem:[%s14] sm:%s3] %v13
    %s16 = scalar_lea.vmem %s0, 20
    %v17 = vld [vmem:[%s16] sm:%s3]
    %s18 = scalar_lea.vmem [#allocation0], 40
    %19 = vst [vmem:[%s18] sm:%s3] %v17
    %s20 = scalar_lea.vmem %s0, 16
    %v21 = vld [vmem:[%s20] sm:%s3]
    %s22 = scalar_lea.vmem [#allocation0], 32
    %23 = vst [vmem:[%s22] sm:%s3] %v21
    %s24 = scalar_lea.vmem %s0, 12
    %v25 = vld [vmem:[%s24] sm:%s3]
    %s26 = scalar_lea.vmem [#allocation0], 24
    %27 = vst [vmem:[%s26] sm:%s3] %v25
    %s28 = scalar_lea.vmem %s0, 8
    %v29 = vld [vmem:[%s28] sm:%s3]
    %s30 = scalar_lea.vmem [#allocation0], 16
    %31 = vst [vmem:[%s30] sm:%s3] %v29
    %s32 = scalar_lea.vmem %s0, 4
    %v33 = vld [vmem:[%s32] sm:%s3]
    %s34 = scalar_lea.vmem [#allocation0], 8
    %35 = vst [vmem:[%s34] sm:%s3] %v33
    %v36 = vld [vmem:[%s0] sm:%s3]
    %37 = vst [vmem:[#allocation0] sm:%s3] %v36
    %v38 = vld [vmem:[#allocation0] ss:$8 sm:$0xf]
    %v39 = vld [vmem:[#allocation0] ss:$8 sm:$0xf0]
    %vm40 = vcmask 1047556
    %v41 = vsel %vm40, %v39, %v38
    %vm42 = vcmask 261120
    %43 = vst.msk [vmem:[%s1] sm:$0xff] %vm42, %v41
    %s44 = scalar_lea.vmem [#allocation0], 64
    %v45 = vld [vmem:[%s44] sm:$0x1]
    %vm46 = vcmask 261120
    %s47 = scalar_lea.vmem %s1, 8
    %48 = vst.msk [vmem:[%s47] sm:$0x1] %vm46, %v45
    %s49 = scalar_lea.vmem [#allocation0], 3
    %v50 = vld [vmem:[%s49] ss:$8 sm:$0xf]
    %s51 = scalar_lea.vmem [#allocation0], 3
    %v52 = vld [vmem:[%s51] ss:$8 sm:$0xf0]
    %vm53 = vcmask 1047556
    %v54 = vsel %vm53, %v52, %v50
    %55 = vrot.lane.b32.xlu0 %v54, 96
    %v56 = vpop.permute.xlu0 %55
    %vm57 = vcmask 1048320
    %58 = vst.msk [vmem:[%s1] sm:$0xff] %vm57, %v56
    %s59 = scalar_lea.vmem [#allocation0], 67
    %v60 = vld [vmem:[%s59] sm:$0x1]
    %61 = vrot.lane.b32.xlu0 %v60, 96
    %v62 = vpop.permute.xlu0 %61
    %vm63 = vcmask 1048320
    %s64 = scalar_lea.vmem %s1, 8
    %65 = vst.msk [vmem:[%s64] sm:$0x1] %vm63, %v62
    %s66 = scalar_lea.vmem [#allocation0], 2
    %v67 = vld [vmem:[%s66] ss:$8 sm:$0xf]
    %s68 = scalar_lea.vmem [#allocation0], 2
    %v69 = vld [vmem:[%s68] ss:$8 sm:$0xf0]
    %vm70 = vcmask 1047556
    %v71 = vsel %vm70, %v69, %v67
    %72 = vrot.lane.b32.xlu0 %v71, 64
    %v73 = vpop.permute.xlu0 %72
    %vm74 = vcmask 785920
    %75 = vst.msk [vmem:[%s1] sm:$0xff] %vm74, %v73
    %s76 = scalar_lea.vmem [#allocation0], 66
    %v77 = vld [vmem:[%s76] sm:$0x1]
    %78 = vrot.lane.b32.xlu0 %v77, 64
    %v79 = vpop.permute.xlu0 %78
    %vm80 = vcmask 785920
    %s81 = scalar_lea.vmem %s1, 8
    %82 = vst.msk [vmem:[%s81] sm:$0x1] %vm80, %v79
    %s83 = scalar_lea.vmem [#allocation0], 1
    %v84 = vld [vmem:[%s83] ss:$8 sm:$0xf]
    %s85 = scalar_lea.vmem [#allocation0], 1
    %v86 = vld [vmem:[%s85] ss:$8 sm:$0xf0]
    %vm87 = vcmask 1047556
    %v88 = vsel %vm87, %v86, %v84
    %89 = vrot.lane.b32.xlu0 %v88, 32
    %v90 = vpop.permute.xlu0 %89
    %vm91 = vcmask 523520
    %92 = vst.msk [vmem:[%s1] sm:$0xff] %vm91, %v90
    %s93 = scalar_lea.vmem [#allocation0], 65
    %v94 = vld [vmem:[%s93] sm:$0x1]
    %95 = vrot.lane.b32.xlu0 %v94, 32
    %v96 = vpop.permute.xlu0 %95
    %vm97 = vcmask 523520
    %s98 = scalar_lea.vmem %s1, 8
    %99 = vst.msk [vmem:[%s98] sm:$0x1] %vm97, %v96

// kernel: gmm_loss.1
$region0: #{gmm_loss.1}
  #allocation0 [shape = 'u32[]', space=smem, size = 0x4, offset = 0x4, fixed_abs, tag = 'smem constant byte address 0x4 - core index']
  #allocation1 [shape = 'u32[72,128]{1,0:T(1,128)}', space=vmem, size = 0x9000, scoped, tag = 'internal scratch']
  %s0 = inlined_call_operand.vmem [shape: f32[8,128], index: 0, kind: input, shape index: {}]
  %s1 = inlined_call_operand.vmem [shape: f32[8,128], index: 1, kind: input, shape index: {}]
  %s2 = inlined_call_operand.vmem [shape: f32[8,128], index: 2, kind: input, shape index: {}]
  %s3 = inlined_call_operand.vmem [shape: f32[9,128], index: 3, kind: input, shape index: {}]
  %s4 = inlined_call_operand.vmem [shape: f32[128,4], index: 4, kind: input, shape index: {}]
  %s5 = inlined_call_operand.vmem [shape: f32[9,4], index: 5, kind: input, shape index: {}]
  %s6 = inlined_call_operand.hbm [shape: f32[1,1,1], index: 6, kind: output, shape index: {}]
  %s7 = sld [smem:[#allocation0]]
  $region34: #{gmm_loss.1} parent=0
    _
  %s9 = ssub.s32 1, %s7
  %s10 = scalar_select 0, %s9, %s7
  $region1: #{gmm_loss.1} parent=0
    #allocation2 [shape = 'u8[512]{0}', space=vmem, size = 0x400, scoped, tag = 'output window, operand 0, single buffered']
    #allocation3 [shape = 's32[1]{0}', space=sflag, size = 0x4, scoped, tag = 'scoped memory for gmm_loss.1']
    %11 = vsyncpa [#allocation3], 0
    // Predicated region
    $region2: #{gmm_loss.1} parent=1 // pred_check
      _
    $region3: #{gmm_loss.1} parent=1 // pred_check_branch
      %13 = sbr.rel (0) target = $region5
    $region4: #{gmm_loss.1} parent=1 // pred_region
      _
    $region5: #{gmm_loss.1} parent=1 // pred_fallthru
      _
    // Predicated region
    $region6: #{gmm_loss.1} parent=1 // pred_check
      _
    $region7: #{gmm_loss.1} parent=1 // pred_check_branch
      %15 = sbr.rel (0) target = $region9
    $region8: #{gmm_loss.1} parent=1 // pred_region
      _
    $region9: #{gmm_loss.1} parent=1 // pred_fallthru
      _
    // Predicated region
    $region10: #{gmm_loss.1} parent=1 // pred_check
      _
    $region11: #{gmm_loss.1} parent=1 // pred_check_branch
      %17 = sbr.rel (0) target = $region13
    $region12: #{gmm_loss.1} parent=1 // pred_region
      _
    $region13: #{gmm_loss.1} parent=1 // pred_fallthru
      _
    // Predicated region
    $region14: #{gmm_loss.1} parent=1 // pred_check
      _
    $region15: #{gmm_loss.1} parent=1 // pred_check_branch
      %19 = sbr.rel (0) target = $region17
    $region16: #{gmm_loss.1} parent=1 // pred_region
      _
    $region17: #{gmm_loss.1} parent=1 // pred_fallthru
      _
    // Predicated region
    $region18: #{gmm_loss.1} parent=1 // pred_check
      _
    $region19: #{gmm_loss.1} parent=1 // pred_check_branch
      %21 = sbr.rel (0) target = $region21
    $region20: #{gmm_loss.1} parent=1 // pred_region
      _
    $region21: #{gmm_loss.1} parent=1 // pred_fallthru
      _
    // Predicated region
    $region22: #{gmm_loss.1} parent=1 // pred_check
      _
    $region23: #{gmm_loss.1} parent=1 // pred_check_branch
      %23 = sbr.rel (0) target = $region25
    $region24: #{gmm_loss.1} parent=1 // pred_region
      _
    $region25: #{gmm_loss.1} parent=1 // pred_fallthru
      _
    %v24 = vld [vmem:[%s0] sm:$0xff]
    %v25 = vld [vmem:[%s1] sm:$0xff]
    %v26 = vld [vmem:[%s2] sm:$0xff]
    %v27 = vmul.f32 %v25, 1.442695
    %v28 = vpow.pop %v27
    %v29 = vld [vmem:[%s3] sm:$0xff]
    %v30 = vld [vmem:[%s3 + $0x8] sm:$0x1]
    %v31 = vld [vmem:[%s4] sm:$0xff]
    %v32 = vld [vmem:[%s4 + $0x8] sm:$0xff]
    %v33 = vld [vmem:[%s4 + $0x10] sm:$0xff]
    %v34 = vld [vmem:[%s4 + $0x18] sm:$0xff]
    %v35 = vld [vmem:[%s4 + $0x20] sm:$0xff]
    %v36 = vld [vmem:[%s4 + $0x28] sm:$0xff]
    %v37 = vld [vmem:[%s4 + $0x30] sm:$0xff]
    %v38 = vld [vmem:[%s4 + $0x38] sm:$0xff]
    %v39 = vld [vmem:[%s4 + $0x40] sm:$0xff]
    %v40 = vld [vmem:[%s4 + $0x48] sm:$0xff]
    %v41 = vld [vmem:[%s4 + $0x50] sm:$0xff]
    %v42 = vld [vmem:[%s4 + $0x58] sm:$0xff]
    %v43 = vld [vmem:[%s4 + $0x60] sm:$0xff]
    %v44 = vld [vmem:[%s4 + $0x68] sm:$0xff]
    %v45 = vld [vmem:[%s4 + $0x70] sm:$0xff]
    %v46 = vld [vmem:[%s4 + $0x78] sm:$0xff]
    %v47 = vld [vmem:[%s5] sm:$0xff]
    %v48 = vld [vmem:[%s5 + $0x8] sm:$0x1]
    %v49 = vand.u32 %v46, 4294901760
    %50 = vmatpush.msra.mxu0 %v49
    %v51 = vand.u32 %v45, 4294901760
    %52 = vmatpush.msra.mxu0 %v51
    %v53 = vand.u32 %v44, 4294901760
    %54 = vmatpush.msra.mxu0 %v53
    %v55 = vand.u32 %v43, 4294901760
    %56 = vmatpush.msra.mxu0 %v55
    %v57 = vand.u32 %v42, 4294901760
    %58 = vmatpush.msra.mxu0 %v57
    %v59 = vand.u32 %v41, 4294901760
    %60 = vmatpush.msra.mxu0 %v59
    %v61 = vand.u32 %v40, 4294901760
    %62 = vmatpush.msra.mxu0 %v61
    %v63 = vand.u32 %v39, 4294901760
    %64 = vmatpush.msra.mxu0 %v63
    %v65 = vand.u32 %v38, 4294901760
    %66 = vmatpush.msra.mxu0 %v65
    %v67 = vand.u32 %v37, 4294901760
    %68 = vmatpush.msra.mxu0 %v67
    %v69 = vand.u32 %v36, 4294901760
    %70 = vmatpush.msra.mxu0 %v69
    %v71 = vand.u32 %v35, 4294901760
    %72 = vmatpush.msra.mxu0 %v71
    %v73 = vand.u32 %v34, 4294901760
    %74 = vmatpush.msra.mxu0 %v73
    %v75 = vand.u32 %v33, 4294901760
    %76 = vmatpush.msra.mxu0 %v75
    %v77 = vand.u32 %v32, 4294901760
    %78 = vmatpush.msra.mxu0 %v77
    %v79 = vand.u32 %v31, 4294901760
    %80 = vmatpush.msra.mxu0 %v79
    %v81 = vand.u32 %v25, 4294901760
    %v82 = vsub.f32 %v25, %v81
    %v83 = vand.u32 %v82, 4294901760
    %v84 = vsub.f32 %v82, %v83
    %v85 = vand.u32 %v84, 4294901760
    %86 = vmatmul.f32.gmra.mxu0 %v85
    %v87 = vpop.f32.mrf.mxu0
    %v88 = vadd.f32 32.0, %v87
    %89 = vdwg.mxu0
    %v90 = vand.u32 %v46, 4294901760
    %v91 = vsub.f32 %v46, %v90
    %v92 = vand.u32 %v91, 4294901760
    %v93 = vsub.f32 %v91, %v92
    %v94 = vand.u32 %v93, 4294901760
    %95 = vmatpush.msra.mxu0 %v94
    %v96 = vand.u32 %v45, 4294901760
    %v97 = vsub.f32 %v45, %v96
    %v98 = vand.u32 %v97, 4294901760
    %v99 = vsub.f32 %v97, %v98
    %v100 = vand.u32 %v99, 4294901760
    %101 = vmatpush.msra.mxu0 %v100
    %v102 = vand.u32 %v44, 4294901760
    %v103 = vsub.f32 %v44, %v102
    %v104 = vand.u32 %v103, 4294901760
    %v105 = vsub.f32 %v103, %v104
    %v106 = vand.u32 %v105, 4294901760
    %107 = vmatpush.msra.mxu0 %v106
    %v108 = vand.u32 %v43, 4294901760
    %v109 = vsub.f32 %v43, %v108
    %v110 = vand.u32 %v109, 4294901760
    %v111 = vsub.f32 %v109, %v110
    %v112 = vand.u32 %v111, 4294901760
    %113 = vmatpush.msra.mxu0 %v112
    %v114 = vand.u32 %v42, 4294901760
    %v115 = vsub.f32 %v42, %v114
    %v116 = vand.u32 %v115, 4294901760
    %v117 = vsub.f32 %v115, %v116
    %v118 = vand.u32 %v117, 4294901760
    %119 = vmatpush.msra.mxu0 %v118
    %v120 = vand.u32 %v41, 4294901760
    %v121 = vsub.f32 %v41, %v120
    %v122 = vand.u32 %v121, 4294901760
    %v123 = vsub.f32 %v121, %v122
    %v124 = vand.u32 %v123, 4294901760
    %125 = vmatpush.msra.mxu0 %v124
    %v126 = vand.u32 %v40, 4294901760
    %v127 = vsub.f32 %v40, %v126
    %v128 = vand.u32 %v127, 4294901760
    %v129 = vsub.f32 %v127, %v128
    %v130 = vand.u32 %v129, 4294901760
    %131 = vmatpush.msra.mxu0 %v130
    %v132 = vand.u32 %v39, 4294901760
    %v133 = vsub.f32 %v39, %v132
    %v134 = vand.u32 %v133, 4294901760
    %v135 = vsub.f32 %v133, %v134
    %v136 = vand.u32 %v135, 4294901760
    %137 = vmatpush.msra.mxu0 %v136
    %v138 = vand.u32 %v38, 4294901760
    %v139 = vsub.f32 %v38, %v138
    %v140 = vand.u32 %v139, 4294901760
    %v141 = vsub.f32 %v139, %v140
    %v142 = vand.u32 %v141, 4294901760
    %143 = vmatpush.msra.mxu0 %v142
    %v144 = vand.u32 %v37, 4294901760
    %v145 = vsub.f32 %v37, %v144
    %v146 = vand.u32 %v145, 4294901760
    %v147 = vsub.f32 %v145, %v146
    %v148 = vand.u32 %v147, 4294901760
    %149 = vmatpush.msra.mxu0 %v148
    %v150 = vand.u32 %v36, 4294901760
    %v151 = vsub.f32 %v36, %v150
    %v152 = vand.u32 %v151, 4294901760
    %v153 = vsub.f32 %v151, %v152
    %v154 = vand.u32 %v153, 4294901760
    %155 = vmatpush.msra.mxu0 %v154
    %v156 = vand.u32 %v35, 4294901760
    %v157 = vsub.f32 %v35, %v156
    %v158 = vand.u32 %v157, 4294901760
    %v159 = vsub.f32 %v157, %v158
    %v160 = vand.u32 %v159, 4294901760
    %161 = vmatpush.msra.mxu0 %v160
    %v162 = vand.u32 %v34, 4294901760
    %v163 = vsub.f32 %v34, %v162
    %v164 = vand.u32 %v163, 4294901760
    %v165 = vsub.f32 %v163, %v164
    %v166 = vand.u32 %v165, 4294901760
    %167 = vmatpush.msra.mxu0 %v166
    %v168 = vand.u32 %v33, 4294901760
    %v169 = vsub.f32 %v33, %v168
    %v170 = vand.u32 %v169, 4294901760
    %v171 = vsub.f32 %v169, %v170
    %v172 = vand.u32 %v171, 4294901760
    %173 = vmatpush.msra.mxu0 %v172
    %v174 = vand.u32 %v32, 4294901760
    %v175 = vsub.f32 %v32, %v174
    %v176 = vand.u32 %v175, 4294901760
    %v177 = vsub.f32 %v175, %v176
    %v178 = vand.u32 %v177, 4294901760
    %179 = vmatpush.msra.mxu0 %v178
    %v180 = vand.u32 %v31, 4294901760
    %v181 = vsub.f32 %v31, %v180
    %v182 = vand.u32 %v181, 4294901760
    %v183 = vsub.f32 %v181, %v182
    %v184 = vand.u32 %v183, 4294901760
    %185 = vmatpush.msra.mxu0 %v184
    %v186 = vand.u32 %v25, 4294901760
    %187 = vmatmul.f32.gmra.mxu0 %v186
    %v188 = vpop.f32.mrf.mxu0
    %v189 = vadd.f32 %v88, %v188
    %190 = vdwg.mxu0
    %v191 = vand.u32 %v46, 4294901760
    %v192 = vsub.f32 %v46, %v191
    %193 = vmatpush.msra.mxu0 %v192
    %v194 = vand.u32 %v45, 4294901760
    %v195 = vsub.f32 %v45, %v194
    %196 = vmatpush.msra.mxu0 %v195
    %v197 = vand.u32 %v44, 4294901760
    %v198 = vsub.f32 %v44, %v197
    %199 = vmatpush.msra.mxu0 %v198
    %v200 = vand.u32 %v43, 4294901760
    %v201 = vsub.f32 %v43, %v200
    %202 = vmatpush.msra.mxu0 %v201
    %v203 = vand.u32 %v42, 4294901760
    %v204 = vsub.f32 %v42, %v203
    %205 = vmatpush.msra.mxu0 %v204
    %v206 = vand.u32 %v41, 4294901760
    %v207 = vsub.f32 %v41, %v206
    %208 = vmatpush.msra.mxu0 %v207
    %v209 = vand.u32 %v40, 4294901760
    %v210 = vsub.f32 %v40, %v209
    %211 = vmatpush.msra.mxu0 %v210
    %v212 = vand.u32 %v39, 4294901760
    %v213 = vsub.f32 %v39, %v212
    %214 = vmatpush.msra.mxu0 %v213
    %v215 = vand.u32 %v38, 4294901760
    %v216 = vsub.f32 %v38, %v215
    %217 = vmatpush.msra.mxu0 %v216
    %v218 = vand.u32 %v37, 4294901760
    %v219 = vsub.f32 %v37, %v218
    %220 = vmatpush.msra.mxu0 %v219
    %v221 = vand.u32 %v36, 4294901760
    %v222 = vsub.f32 %v36, %v221
    %223 = vmatpush.msra.mxu0 %v222
    %v224 = vand.u32 %v35, 4294901760
    %v225 = vsub.f32 %v35, %v224
    %226 = vmatpush.msra.mxu0 %v225
    %v227 = vand.u32 %v34, 4294901760
    %v228 = vsub.f32 %v34, %v227
    %229 = vmatpush.msra.mxu0 %v228
    %v230 = vand.u32 %v33, 4294901760
    %v231 = vsub.f32 %v33, %v230
    %232 = vmatpush.msra.mxu0 %v231
    %v233 = vand.u32 %v32, 4294901760
    %v234 = vsub.f32 %v32, %v233
    %235 = vmatpush.msra.mxu0 %v234
    %v236 = vand.u32 %v31, 4294901760
    %v237 = vsub.f32 %v31, %v236
    %238 = vmatpush.msra.mxu0 %v237
    %v239 = vand.u32 %v25, 4294901760
    %v240 = vsub.f32 %v25, %v239
    %241 = vmatmul.f32.gmra.mxu0 %v240
    %v242 = vpop.f32.mrf.mxu0
    %v243 = vadd.f32 %v189, %v242
    %244 = vdwg.mxu0
    %v245 = vand.u32 %v46, 4294901760
    %246 = vmatpush.msra.mxu0 %v245
    %v247 = vand.u32 %v45, 4294901760
    %248 = vmatpush.msra.mxu0 %v247
    %v249 = vand.u32 %v44, 4294901760
    %250 = vmatpush.msra.mxu0 %v249
    %v251 = vand.u32 %v43, 4294901760
    %252 = vmatpush.msra.mxu0 %v251
    %v253 = vand.u32 %v42, 4294901760
    %254 = vmatpush.msra.mxu0 %v253
    %v255 = vand.u32 %v41, 4294901760
    %256 = vmatpush.msra.mxu0 %v255
    %v257 = vand.u32 %v40, 4294901760
    %258 = vmatpush.msra.mxu0 %v257
    %v259 = vand.u32 %v39, 4294901760
    %260 = vmatpush.msra.mxu0 %v259
    %v261 = vand.u32 %v38, 4294901760
    %262 = vmatpush.msra.mxu0 %v261
    %v263 = vand.u32 %v37, 4294901760
    %264 = vmatpush.msra.mxu0 %v263
    %v265 = vand.u32 %v36, 4294901760
    %266 = vmatpush.msra.mxu0 %v265
    %v267 = vand.u32 %v35, 4294901760
    %268 = vmatpush.msra.mxu0 %v267
    %v269 = vand.u32 %v34, 4294901760
    %270 = vmatpush.msra.mxu0 %v269
    %v271 = vand.u32 %v33, 4294901760
    %272 = vmatpush.msra.mxu0 %v271
    %v273 = vand.u32 %v32, 4294901760
    %274 = vmatpush.msra.mxu0 %v273
    %v275 = vand.u32 %v31, 4294901760
    %276 = vmatpush.msra.mxu0 %v275
    %v277 = vand.u32 %v25, 4294901760
    %v278 = vsub.f32 %v25, %v277
    %v279 = vand.u32 %v278, 4294901760
    %280 = vmatmul.f32.gmra.mxu0 %v279
    %v281 = vpop.f32.mrf.mxu0
    %v282 = vadd.f32 %v243, %v281
    %283 = vdwg.mxu0
    %v284 = vand.u32 %v46, 4294901760
    %v285 = vsub.f32 %v46, %v284
    %v286 = vand.u32 %v285, 4294901760
    %287 = vmatpush.msra.mxu0 %v286
    %v288 = vand.u32 %v45, 4294901760
    %v289 = vsub.f32 %v45, %v288
    %v290 = vand.u32 %v289, 4294901760
    %291 = vmatpush.msra.mxu0 %v290
    %v292 = vand.u32 %v44, 4294901760
    %v293 = vsub.f32 %v44, %v292
    %v294 = vand.u32 %v293, 4294901760
    %295 = vmatpush.msra.mxu0 %v294
    %v296 = vand.u32 %v43, 4294901760
    %v297 = vsub.f32 %v43, %v296
    %v298 = vand.u32 %v297, 4294901760
    %299 = vmatpush.msra.mxu0 %v298
    %v300 = vand.u32 %v42, 4294901760
    %v301 = vsub.f32 %v42, %v300
    %v302 = vand.u32 %v301, 4294901760
    %303 = vmatpush.msra.mxu0 %v302
    %v304 = vand.u32 %v41, 4294901760
    %v305 = vsub.f32 %v41, %v304
    %v306 = vand.u32 %v305, 4294901760
    %307 = vmatpush.msra.mxu0 %v306
    %v308 = vand.u32 %v40, 4294901760
    %v309 = vsub.f32 %v40, %v308
    %v310 = vand.u32 %v309, 4294901760
    %311 = vmatpush.msra.mxu0 %v310
    %v312 = vand.u32 %v39, 4294901760
    %v313 = vsub.f32 %v39, %v312
    %v314 = vand.u32 %v313, 4294901760
    %315 = vmatpush.msra.mxu0 %v314
    %v316 = vand.u32 %v38, 4294901760
    %v317 = vsub.f32 %v38, %v316
    %v318 = vand.u32 %v317, 4294901760
    %319 = vmatpush.msra.mxu0 %v318
    %v320 = vand.u32 %v37, 4294901760
    %v321 = vsub.f32 %v37, %v320
    %v322 = vand.u32 %v321, 4294901760
    %323 = vmatpush.msra.mxu0 %v322
    %v324 = vand.u32 %v36, 4294901760
    %v325 = vsub.f32 %v36, %v324
    %v326 = vand.u32 %v325, 4294901760
    %327 = vmatpush.msra.mxu0 %v326
    %v328 = vand.u32 %v35, 4294901760
    %v329 = vsub.f32 %v35, %v328
    %v330 = vand.u32 %v329, 4294901760
    %331 = vmatpush.msra.mxu0 %v330
    %v332 = vand.u32 %v34, 4294901760
    %v333 = vsub.f32 %v34, %v332
    %v334 = vand.u32 %v333, 4294901760
    %335 = vmatpush.msra.mxu0 %v334
    %v336 = vand.u32 %v33, 4294901760
    %v337 = vsub.f32 %v33, %v336
    %v338 = vand.u32 %v337, 4294901760
    %339 = vmatpush.msra.mxu0 %v338
    %v340 = vand.u32 %v32, 4294901760
    %v341 = vsub.f32 %v32, %v340
    %v342 = vand.u32 %v341, 4294901760
    %343 = vmatpush.msra.mxu0 %v342
    %v344 = vand.u32 %v31, 4294901760
    %v345 = vsub.f32 %v31, %v344
    %v346 = vand.u32 %v345, 4294901760
    %347 = vmatpush.msra.mxu0 %v346
    %v348 = vand.u32 %v25, 4294901760
    %349 = vmatmul.f32.gmra.mxu0 %v348
    %v350 = vpop.f32.mrf.mxu0
    %v351 = vadd.f32 %v282, %v350
    %352 = vdwg.mxu0
    %v353 = vand.u32 %v46, 4294901760
    %354 = vmatpush.msra.mxu0 %v353
    %v355 = vand.u32 %v45, 4294901760
    %356 = vmatpush.msra.mxu0 %v355
    %v357 = vand.u32 %v44, 4294901760
    %358 = vmatpush.msra.mxu0 %v357
    %v359 = vand.u32 %v43, 4294901760
    %360 = vmatpush.msra.mxu0 %v359
    %v361 = vand.u32 %v42, 4294901760
    %362 = vmatpush.msra.mxu0 %v361
    %v363 = vand.u32 %v41, 4294901760
    %364 = vmatpush.msra.mxu0 %v363
    %v365 = vand.u32 %v40, 4294901760
    %366 = vmatpush.msra.mxu0 %v365
    %v367 = vand.u32 %v39, 4294901760
    %368 = vmatpush.msra.mxu0 %v367
    %v369 = vand.u32 %v38, 4294901760
    %370 = vmatpush.msra.mxu0 %v369
    %v371 = vand.u32 %v37, 4294901760
    %372 = vmatpush.msra.mxu0 %v371
    %v373 = vand.u32 %v36, 4294901760
    %374 = vmatpush.msra.mxu0 %v373
    %v375 = vand.u32 %v35, 4294901760
    %376 = vmatpush.msra.mxu0 %v375
    %v377 = vand.u32 %v34, 4294901760
    %378 = vmatpush.msra.mxu0 %v377
    %v379 = vand.u32 %v33, 4294901760
    %380 = vmatpush.msra.mxu0 %v379
    %v381 = vand.u32 %v32, 4294901760
    %382 = vmatpush.msra.mxu0 %v381
    %v383 = vand.u32 %v31, 4294901760
    %384 = vmatpush.msra.mxu0 %v383
    %v385 = vand.u32 %v25, 4294901760
    %386 = vmatmul.f32.gmra.mxu0 %v385
    %v387 = vpop.f32.mrf.mxu0
    %v388 = vadd.f32 %v351, %v387
    %389 = vdwg.mxu0
    %v390 = vmul.f32 %v388, -0.5
    %v391 = vperm.slane %v29, 0
    %v392 = vsub.f32 %v26, %v391
    %v393 = vsub.f32 %v24, %v391
    %v394 = vmul.f32 %v392, %v392
    %v395 = vperm.slane %v29, 6
    %v396 = vmul.f32 %v394, %v395
    %v397 = vand.u32 %v46, 4294901760
    %398 = vmatpush.msra.mxu0 %v397
    %v399 = vand.u32 %v45, 4294901760
    %400 = vmatpush.msra.mxu0 %v399
    %v401 = vand.u32 %v44, 4294901760
    %402 = vmatpush.msra.mxu0 %v401
    %v403 = vand.u32 %v43, 4294901760
    %404 = vmatpush.msra.mxu0 %v403
    %v405 = vand.u32 %v42, 4294901760
    %406 = vmatpush.msra.mxu0 %v405
    %v407 = vand.u32 %v41, 4294901760
    %408 = vmatpush.msra.mxu0 %v407
    %v409 = vand.u32 %v40, 4294901760
    %410 = vmatpush.msra.mxu0 %v409
    %v411 = vand.u32 %v39, 4294901760
    %412 = vmatpush.msra.mxu0 %v411
    %v413 = vand.u32 %v38, 4294901760
    %414 = vmatpush.msra.mxu0 %v413
    %v415 = vand.u32 %v37, 4294901760
    %416 = vmatpush.msra.mxu0 %v415
    %v417 = vand.u32 %v36, 4294901760
    %418 = vmatpush.msra.mxu0 %v417
    %v419 = vand.u32 %v35, 4294901760
    %420 = vmatpush.msra.mxu0 %v419
    %v421 = vand.u32 %v34, 4294901760
    %422 = vmatpush.msra.mxu0 %v421
    %v423 = vand.u32 %v33, 4294901760
    %424 = vmatpush.msra.mxu0 %v423
    %v425 = vand.u32 %v32, 4294901760
    %426 = vmatpush.msra.mxu0 %v425
    %v427 = vand.u32 %v31, 4294901760
    %428 = vmatpush.msra.mxu0 %v427
    %v429 = vand.u32 %v396, 4294901760
    %v430 = vsub.f32 %v396, %v429
    %v431 = vand.u32 %v430, 4294901760
    %v432 = vsub.f32 %v430, %v431
    %v433 = vand.u32 %v432, 4294901760
    %434 = vmatmul.f32.gmra.mxu0 %v433
    %v435 = vpop.f32.mrf.mxu0
    %v436 = vadd.f32 0.0, %v435
    %437 = vdwg.mxu0
    %v438 = vand.u32 %v46, 4294901760
    %v439 = vsub.f32 %v46, %v438
    %v440 = vand.u32 %v439, 4294901760
    %v441 = vsub.f32 %v439, %v440
    %v442 = vand.u32 %v441, 4294901760
    %443 = vmatpush.msra.mxu0 %v442
    %v444 = vand.u32 %v45, 4294901760
    %v445 = vsub.f32 %v45, %v444
    %v446 = vand.u32 %v445, 4294901760
    %v447 = vsub.f32 %v445, %v446
    %v448 = vand.u32 %v447, 4294901760
    %449 = vmatpush.msra.mxu0 %v448
    %v450 = vand.u32 %v44, 4294901760
    %v451 = vsub.f32 %v44, %v450
    %v452 = vand.u32 %v451, 4294901760
    %v453 = vsub.f32 %v451, %v452
    %v454 = vand.u32 %v453, 4294901760
    %455 = vmatpush.msra.mxu0 %v454
    %v456 = vand.u32 %v43, 4294901760
    %v457 = vsub.f32 %v43, %v456
    %v458 = vand.u32 %v457, 4294901760
    %v459 = vsub.f32 %v457, %v458
    %v460 = vand.u32 %v459, 4294901760
    %461 = vmatpush.msra.mxu0 %v460
    %v462 = vand.u32 %v42, 4294901760
    %v463 = vsub.f32 %v42, %v462
    %v464 = vand.u32 %v463, 4294901760
    %v465 = vsub.f32 %v463, %v464
    %v466 = vand.u32 %v465, 4294901760
    %467 = vmatpush.msra.mxu0 %v466
    %v468 = vand.u32 %v41, 4294901760
    %v469 = vsub.f32 %v41, %v468
    %v470 = vand.u32 %v469, 4294901760
    %v471 = vsub.f32 %v469, %v470
    %v472 = vand.u32 %v471, 4294901760
    %473 = vmatpush.msra.mxu0 %v472
    %v474 = vand.u32 %v40, 4294901760
    %v475 = vsub.f32 %v40, %v474
    %v476 = vand.u32 %v475, 4294901760
    %v477 = vsub.f32 %v475, %v476
    %v478 = vand.u32 %v477, 4294901760
    %479 = vmatpush.msra.mxu0 %v478
    %v480 = vand.u32 %v39, 4294901760
    %v481 = vsub.f32 %v39, %v480
    %v482 = vand.u32 %v481, 4294901760
    %v483 = vsub.f32 %v481, %v482
    %v484 = vand.u32 %v483, 4294901760
    %485 = vmatpush.msra.mxu0 %v484
    %v486 = vand.u32 %v38, 4294901760
    %v487 = vsub.f32 %v38, %v486
    %v488 = vand.u32 %v487, 4294901760
    %v489 = vsub.f32 %v487, %v488
    %v490 = vand.u32 %v489, 4294901760
    %491 = vmatpush.msra.mxu0 %v490
    %v492 = vand.u32 %v37, 4294901760
    %v493 = vsub.f32 %v37, %v492
    %v494 = vand.u32 %v493, 4294901760
    %v495 = vsub.f32 %v493, %v494
    %v496 = vand.u32 %v495, 4294901760
    %497 = vmatpush.msra.mxu0 %v496
    %v498 = vand.u32 %v36, 4294901760
    %v499 = vsub.f32 %v36, %v498
    %v500 = vand.u32 %v499, 4294901760
    %v501 = vsub.f32 %v499, %v500
    %v502 = vand.u32 %v501, 4294901760
    %503 = vmatpush.msra.mxu0 %v502
    %v504 = vand.u32 %v35, 4294901760
    %v505 = vsub.f32 %v35, %v504
    %v506 = vand.u32 %v505, 4294901760
    %v507 = vsub.f32 %v505, %v506
    %v508 = vand.u32 %v507, 4294901760
    %509 = vmatpush.msra.mxu0 %v508
    %v510 = vand.u32 %v34, 4294901760
    %v511 = vsub.f32 %v34, %v510
    %v512 = vand.u32 %v511, 4294901760
    %v513 = vsub.f32 %v511, %v512
    %v514 = vand.u32 %v513, 4294901760
    %515 = vmatpush.msra.mxu0 %v514
    %v516 = vand.u32 %v33, 4294901760
    %v517 = vsub.f32 %v33, %v516
    %v518 = vand.u32 %v517, 4294901760
    %v519 = vsub.f32 %v517, %v518
    %v520 = vand.u32 %v519, 4294901760
    %521 = vmatpush.msra.mxu0 %v520
    %v522 = vand.u32 %v32, 4294901760
    %v523 = vsub.f32 %v32, %v522
    %v524 = vand.u32 %v523, 4294901760
    %v525 = vsub.f32 %v523, %v524
    %v526 = vand.u32 %v525, 4294901760
    %527 = vmatpush.msra.mxu0 %v526
    %v528 = vand.u32 %v31, 4294901760
    %v529 = vsub.f32 %v31, %v528
    %v530 = vand.u32 %v529, 4294901760
    %v531 = vsub.f32 %v529, %v530
    %v532 = vand.u32 %v531, 4294901760
    %533 = vmatpush.msra.mxu0 %v532
    %v534 = vand.u32 %v396, 4294901760
    %535 = vmatmul.f32.gmra.mxu0 %v534
    %v536 = vpop.f32.mrf.mxu0
    %v537 = vadd.f32 %v436, %v536
    %538 = vdwg.mxu0
    %v539 = vand.u32 %v46, 4294901760
    %v540 = vsub.f32 %v46, %v539
    %541 = vmatpush.msra.mxu0 %v540
    %v542 = vand.u32 %v45, 4294901760
    %v543 = vsub.f32 %v45, %v542
    %544 = vmatpush.msra.mxu0 %v543
    %v545 = vand.u32 %v44, 4294901760
    %v546 = vsub.f32 %v44, %v545
    %547 = vmatpush.msra.mxu0 %v546
    %v548 = vand.u32 %v43, 4294901760
    %v549 = vsub.f32 %v43, %v548
    %550 = vmatpush.msra.mxu0 %v549
    %v551 = vand.u32 %v42, 4294901760
    %v552 = vsub.f32 %v42, %v551
    %553 = vmatpush.msra.mxu0 %v552
    %v554 = vand.u32 %v41, 4294901760
    %v555 = vsub.f32 %v41, %v554
    %556 = vmatpush.msra.mxu0 %v555
    %v557 = vand.u32 %v40, 4294901760
    %v558 = vsub.f32 %v40, %v557
    %559 = vmatpush.msra.mxu0 %v558
    %v560 = vand.u32 %v39, 4294901760
    %v561 = vsub.f32 %v39, %v560
    %562 = vmatpush.msra.mxu0 %v561
    %v563 = vand.u32 %v38, 4294901760
    %v564 = vsub.f32 %v38, %v563
    %565 = vmatpush.msra.mxu0 %v564
    %v566 = vand.u32 %v37, 4294901760
    %v567 = vsub.f32 %v37, %v566
    %568 = vmatpush.msra.mxu0 %v567
    %v569 = vand.u32 %v36, 4294901760
    %v570 = vsub.f32 %v36, %v569
    %571 = vmatpush.msra.mxu0 %v570
    %v572 = vand.u32 %v35, 4294901760
    %v573 = vsub.f32 %v35, %v572
    %574 = vmatpush.msra.mxu0 %v573
    %v575 = vand.u32 %v34, 4294901760
    %v576 = vsub.f32 %v34, %v575
    %577 = vmatpush.msra.mxu0 %v576
    %v578 = vand.u32 %v33, 4294901760
    %v579 = vsub.f32 %v33, %v578
    %580 = vmatpush.msra.mxu0 %v579
    %v581 = vand.u32 %v32, 4294901760
    %v582 = vsub.f32 %v32, %v581
    %583 = vmatpush.msra.mxu0 %v582
    %v584 = vand.u32 %v31, 4294901760
    %v585 = vsub.f32 %v31, %v584
    %586 = vmatpush.msra.mxu0 %v585
    %v587 = vand.u32 %v396, 4294901760
    %v588 = vsub.f32 %v396, %v587
    %589 = vmatmul.f32.gmra.mxu0 %v588
    %v590 = vpop.f32.mrf.mxu0
    %v591 = vadd.f32 %v537, %v590
    %592 = vdwg.mxu0
    %v593 = vand.u32 %v46, 4294901760
    %594 = vmatpush.msra.mxu0 %v593
    %v595 = vand.u32 %v45, 4294901760
    %596 = vmatpush.msra.mxu0 %v595
    %v597 = vand.u32 %v44, 4294901760
    %598 = vmatpush.msra.mxu0 %v597
    %v599 = vand.u32 %v43, 4294901760
    %600 = vmatpush.msra.mxu0 %v599
    %v601 = vand.u32 %v42, 4294901760
    %602 = vmatpush.msra.mxu0 %v601
    %v603 = vand.u32 %v41, 4294901760
    %604 = vmatpush.msra.mxu0 %v603
    %v605 = vand.u32 %v40, 4294901760
    %606 = vmatpush.msra.mxu0 %v605
    %v607 = vand.u32 %v39, 4294901760
    %608 = vmatpush.msra.mxu0 %v607
    %v609 = vand.u32 %v38, 4294901760
    %610 = vmatpush.msra.mxu0 %v609
    %v611 = vand.u32 %v37, 4294901760
    %612 = vmatpush.msra.mxu0 %v611
    %v613 = vand.u32 %v36, 4294901760
    %614 = vmatpush.msra.mxu0 %v613
    %v615 = vand.u32 %v35, 4294901760
    %616 = vmatpush.msra.mxu0 %v615
    %v617 = vand.u32 %v34, 4294901760
    %618 = vmatpush.msra.mxu0 %v617
    %v619 = vand.u32 %v33, 4294901760
    %620 = vmatpush.msra.mxu0 %v619
    %v621 = vand.u32 %v32, 4294901760
    %622 = vmatpush.msra.mxu0 %v621
    %v623 = vand.u32 %v31, 4294901760
    %624 = vmatpush.msra.mxu0 %v623
    %v625 = vand.u32 %v396, 4294901760
    %v626 = vsub.f32 %v396, %v625
    %v627 = vand.u32 %v626, 4294901760
    %628 = vmatmul.f32.gmra.mxu0 %v627
    %v629 = vpop.f32.mrf.mxu0
    %v630 = vadd.f32 %v591, %v629
    %631 = vdwg.mxu0
    %v632 = vand.u32 %v46, 4294901760
    %v633 = vsub.f32 %v46, %v632
    %v634 = vand.u32 %v633, 4294901760
    %635 = vmatpush.msra.mxu0 %v634
    %v636 = vand.u32 %v45, 4294901760
    %v637 = vsub.f32 %v45, %v636
    %v638 = vand.u32 %v637, 4294901760
    %639 = vmatpush.msra.mxu0 %v638
    %v640 = vand.u32 %v44, 4294901760
    %v641 = vsub.f32 %v44, %v640
    %v642 = vand.u32 %v641, 4294901760
    %643 = vmatpush.msra.mxu0 %v642
    %v644 = vand.u32 %v43, 4294901760
    %v645 = vsub.f32 %v43, %v644
    %v646 = vand.u32 %v645, 4294901760
    %647 = vmatpush.msra.mxu0 %v646
    %v648 = vand.u32 %v42, 4294901760
    %v649 = vsub.f32 %v42, %v648
    %v650 = vand.u32 %v649, 4294901760
    %651 = vmatpush.msra.mxu0 %v650
    %v652 = vand.u32 %v41, 4294901760
    %v653 = vsub.f32 %v41, %v652
    %v654 = vand.u32 %v653, 4294901760
    %655 = vmatpush.msra.mxu0 %v654
    %v656 = vand.u32 %v40, 4294901760
    %v657 = vsub.f32 %v40, %v656
    %v658 = vand.u32 %v657, 4294901760
    %659 = vmatpush.msra.mxu0 %v658
    %v660 = vand.u32 %v39, 4294901760
    %v661 = vsub.f32 %v39, %v660
    %v662 = vand.u32 %v661, 4294901760
    %663 = vmatpush.msra.mxu0 %v662
    %v664 = vand.u32 %v38, 4294901760
    %v665 = vsub.f32 %v38, %v664
    %v666 = vand.u32 %v665, 4294901760
    %667 = vmatpush.msra.mxu0 %v666
    %v668 = vand.u32 %v37, 4294901760
    %v669 = vsub.f32 %v37, %v668
    %v670 = vand.u32 %v669, 4294901760
    %671 = vmatpush.msra.mxu0 %v670
    %v672 = vand.u32 %v36, 4294901760
    %v673 = vsub.f32 %v36, %v672
    %v674 = vand.u32 %v673, 4294901760
    %675 = vmatpush.msra.mxu0 %v674
    %v676 = vand.u32 %v35, 4294901760
    %v677 = vsub.f32 %v35, %v676
    %v678 = vand.u32 %v677, 4294901760
    %679 = vmatpush.msra.mxu0 %v678
    %v680 = vand.u32 %v34, 4294901760
    %v681 = vsub.f32 %v34, %v680
    %v682 = vand.u32 %v681, 4294901760
    %683 = vmatpush.msra.mxu0 %v682
    %v684 = vand.u32 %v33, 4294901760
    %v685 = vsub.f32 %v33, %v684
    %v686 = vand.u32 %v685, 4294901760
    %687 = vmatpush.msra.mxu0 %v686
    %v688 = vand.u32 %v32, 4294901760
    %v689 = vsub.f32 %v32, %v688
    %v690 = vand.u32 %v689, 4294901760
    %691 = vmatpush.msra.mxu0 %v690
    %v692 = vand.u32 %v31, 4294901760
    %v693 = vsub.f32 %v31, %v692
    %v694 = vand.u32 %v693, 4294901760
    %695 = vmatpush.msra.mxu0 %v694
    %v696 = vand.u32 %v396, 4294901760
    %697 = vmatmul.f32.gmra.mxu0 %v696
    %v698 = vpop.f32.mrf.mxu0
    %v699 = vadd.f32 %v630, %v698
    %700 = vdwg.mxu0
    %v701 = vand.u32 %v46, 4294901760
    %702 = vmatpush.msra.mxu0 %v701
    %v703 = vand.u32 %v45, 4294901760
    %704 = vmatpush.msra.mxu0 %v703
    %v705 = vand.u32 %v44, 4294901760
    %706 = vmatpush.msra.mxu0 %v705
    %v707 = vand.u32 %v43, 4294901760
    %708 = vmatpush.msra.mxu0 %v707
    %v709 = vand.u32 %v42, 4294901760
    %710 = vmatpush.msra.mxu0 %v709
    %v711 = vand.u32 %v41, 4294901760
    %712 = vmatpush.msra.mxu0 %v711
    %v713 = vand.u32 %v40, 4294901760
    %714 = vmatpush.msra.mxu0 %v713
    %v715 = vand.u32 %v39, 4294901760
    %716 = vmatpush.msra.mxu0 %v715
    %v717 = vand.u32 %v38, 4294901760
    %718 = vmatpush.msra.mxu0 %v717
    %v719 = vand.u32 %v37, 4294901760
    %720 = vmatpush.msra.mxu0 %v719
    %v721 = vand.u32 %v36, 4294901760
    %722 = vmatpush.msra.mxu0 %v721
    %v723 = vand.u32 %v35, 4294901760
    %724 = vmatpush.msra.mxu0 %v723
    %v725 = vand.u32 %v34, 4294901760
    %726 = vmatpush.msra.mxu0 %v725
    %v727 = vand.u32 %v33, 4294901760
    %728 = vmatpush.msra.mxu0 %v727
    %v729 = vand.u32 %v32, 4294901760
    %730 = vmatpush.msra.mxu0 %v729
    %v731 = vand.u32 %v31, 4294901760
    %732 = vmatpush.msra.mxu0 %v731
    %v733 = vand.u32 %v396, 4294901760
    %734 = vmatmul.f32.gmra.mxu0 %v733
    %v735 = vpop.f32.mrf.mxu0
    %v736 = vadd.f32 %v699, %v735
    %737 = vdwg.mxu0
    %v738 = vperm.slane %v47, 0
    %v739 = vsub.f32 %v738, %v736
    %v740 = vmul.f32 %v393, %v393
    %v741 = vadd.f32 %v28, %v740
    %v742 = vperm.slane %v29, 3
    %v743 = vmul.f32 %v741, %v742
    %v744 = vand.u32 %v46, 4294901760
    %745 = vmatpush.msra.mxu0 %v744
    %v746 = vand.u32 %v45, 4294901760
    %747 = vmatpush.msra.mxu0 %v746
    %v748 = vand.u32 %v44, 4294901760
    %749 = vmatpush.msra.mxu0 %v748
    %v750 = vand.u32 %v43, 4294901760
    %751 = vmatpush.msra.mxu0 %v750
    %v752 = vand.u32 %v42, 4294901760
    %753 = vmatpush.msra.mxu0 %v752
    %v754 = vand.u32 %v41, 4294901760
    %755 = vmatpush.msra.mxu0 %v754
    %v756 = vand.u32 %v40, 4294901760
    %757 = vmatpush.msra.mxu0 %v756
    %v758 = vand.u32 %v39, 4294901760
    %759 = vmatpush.msra.mxu0 %v758
    %v760 = vand.u32 %v38, 4294901760
    %761 = vmatpush.msra.mxu0 %v760
    %v762 = vand.u32 %v37, 4294901760
    %763 = vmatpush.msra.mxu0 %v762
    %v764 = vand.u32 %v36, 4294901760
    %765 = vmatpush.msra.mxu0 %v764
    %v766 = vand.u32 %v35, 4294901760
    %767 = vmatpush.msra.mxu0 %v766
    %v768 = vand.u32 %v34, 4294901760
    %769 = vmatpush.msra.mxu0 %v768
    %v770 = vand.u32 %v33, 4294901760
    %771 = vmatpush.msra.mxu0 %v770
    %v772 = vand.u32 %v32, 4294901760
    %773 = vmatpush.msra.mxu0 %v772
    %v774 = vand.u32 %v31, 4294901760
    %775 = vmatpush.msra.mxu0 %v774
    %v776 = vand.u32 %v743, 4294901760
    %v777 = vsub.f32 %v743, %v776
    %v778 = vand.u32 %v777, 4294901760
    %v779 = vsub.f32 %v777, %v778
    %v780 = vand.u32 %v779, 4294901760
    %781 = vmatmul.f32.gmra.mxu0 %v780
    %v782 = vpop.f32.mrf.mxu0
    %v783 = vadd.f32 0.0, %v782
    %784 = vdwg.mxu0
    %v785 = vand.u32 %v46, 4294901760
    %v786 = vsub.f32 %v46, %v785
    %v787 = vand.u32 %v786, 4294901760
    %v788 = vsub.f32 %v786, %v787
    %v789 = vand.u32 %v788, 4294901760
    %790 = vmatpush.msra.mxu0 %v789
    %v791 = vand.u32 %v45, 4294901760
    %v792 = vsub.f32 %v45, %v791
    %v793 = vand.u32 %v792, 4294901760
    %v794 = vsub.f32 %v792, %v793
    %v795 = vand.u32 %v794, 4294901760
    %796 = vmatpush.msra.mxu0 %v795
    %v797 = vand.u32 %v44, 4294901760
    %v798 = vsub.f32 %v44, %v797
    %v799 = vand.u32 %v798, 4294901760
    %v800 = vsub.f32 %v798, %v799
    %v801 = vand.u32 %v800, 4294901760
    %802 = vmatpush.msra.mxu0 %v801
    %v803 = vand.u32 %v43, 4294901760
    %v804 = vsub.f32 %v43, %v803
    %v805 = vand.u32 %v804, 4294901760
    %v806 = vsub.f32 %v804, %v805
    %v807 = vand.u32 %v806, 4294901760
    %808 = vmatpush.msra.mxu0 %v807
    %v809 = vand.u32 %v42, 4294901760
    %v810 = vsub.f32 %v42, %v809
    %v811 = vand.u32 %v810, 4294901760
    %v812 = vsub.f32 %v810, %v811
    %v813 = vand.u32 %v812, 4294901760
    %814 = vmatpush.msra.mxu0 %v813
    %v815 = vand.u32 %v41, 4294901760
    %v816 = vsub.f32 %v41, %v815
    %v817 = vand.u32 %v816, 4294901760
    %v818 = vsub.f32 %v816, %v817
    %v819 = vand.u32 %v818, 4294901760
    %820 = vmatpush.msra.mxu0 %v819
    %v821 = vand.u32 %v40, 4294901760
    %v822 = vsub.f32 %v40, %v821
    %v823 = vand.u32 %v822, 4294901760
    %v824 = vsub.f32 %v822, %v823
    %v825 = vand.u32 %v824, 4294901760
    %826 = vmatpush.msra.mxu0 %v825
    %v827 = vand.u32 %v39, 4294901760
    %v828 = vsub.f32 %v39, %v827
    %v829 = vand.u32 %v828, 4294901760
    %v830 = vsub.f32 %v828, %v829
    %v831 = vand.u32 %v830, 4294901760
    %832 = vmatpush.msra.mxu0 %v831
    %v833 = vand.u32 %v38, 4294901760
    %v834 = vsub.f32 %v38, %v833
    %v835 = vand.u32 %v834, 4294901760
    %v836 = vsub.f32 %v834, %v835
    %v837 = vand.u32 %v836, 4294901760
    %838 = vmatpush.msra.mxu0 %v837
    %v839 = vand.u32 %v37, 4294901760
    %v840 = vsub.f32 %v37, %v839
    %v841 = vand.u32 %v840, 4294901760
    %v842 = vsub.f32 %v840, %v841
    %v843 = vand.u32 %v842, 4294901760
    %844 = vmatpush.msra.mxu0 %v843
    %v845 = vand.u32 %v36, 4294901760
    %v846 = vsub.f32 %v36, %v845
    %v847 = vand.u32 %v846, 4294901760
    %v848 = vsub.f32 %v846, %v847
    %v849 = vand.u32 %v848, 4294901760
    %850 = vmatpush.msra.mxu0 %v849
    %v851 = vand.u32 %v35, 4294901760
    %v852 = vsub.f32 %v35, %v851
    %v853 = vand.u32 %v852, 4294901760
    %v854 = vsub.f32 %v852, %v853
    %v855 = vand.u32 %v854, 4294901760
    %856 = vmatpush.msra.mxu0 %v855
    %v857 = vand.u32 %v34, 4294901760
    %v858 = vsub.f32 %v34, %v857
    %v859 = vand.u32 %v858, 4294901760
    %v860 = vsub.f32 %v858, %v859
    %v861 = vand.u32 %v860, 4294901760
    %862 = vmatpush.msra.mxu0 %v861
    %v863 = vand.u32 %v33, 4294901760
    %v864 = vsub.f32 %v33, %v863
    %v865 = vand.u32 %v864, 4294901760
    %v866 = vsub.f32 %v864, %v865
    %v867 = vand.u32 %v866, 4294901760
    %868 = vmatpush.msra.mxu0 %v867
    %v869 = vand.u32 %v32, 4294901760
    %v870 = vsub.f32 %v32, %v869
    %v871 = vand.u32 %v870, 4294901760
    %v872 = vsub.f32 %v870, %v871
    %v873 = vand.u32 %v872, 4294901760
    %874 = vmatpush.msra.mxu0 %v873
    %v875 = vand.u32 %v31, 4294901760
    %v876 = vsub.f32 %v31, %v875
    %v877 = vand.u32 %v876, 4294901760
    %v878 = vsub.f32 %v876, %v877
    %v879 = vand.u32 %v878, 4294901760
    %880 = vmatpush.msra.mxu0 %v879
    %v881 = vand.u32 %v743, 4294901760
    %882 = vmatmul.f32.gmra.mxu0 %v881
    %v883 = vpop.f32.mrf.mxu0
    %v884 = vadd.f32 %v783, %v883
    %885 = vdwg.mxu0
    %v886 = vand.u32 %v46, 4294901760
    %v887 = vsub.f32 %v46, %v886
    %888 = vmatpush.msra.mxu0 %v887
    %v889 = vand.u32 %v45, 4294901760
    %v890 = vsub.f32 %v45, %v889
    %891 = vmatpush.msra.mxu0 %v890
    %v892 = vand.u32 %v44, 4294901760
    %v893 = vsub.f32 %v44, %v892
    %894 = vmatpush.msra.mxu0 %v893
    %v895 = vand.u32 %v43, 4294901760
    %v896 = vsub.f32 %v43, %v895
    %897 = vmatpush.msra.mxu0 %v896
    %v898 = vand.u32 %v42, 4294901760
    %v899 = vsub.f32 %v42, %v898
    %900 = vmatpush.msra.mxu0 %v899
    %v901 = vand.u32 %v41, 4294901760
    %v902 = vsub.f32 %v41, %v901
    %903 = vmatpush.msra.mxu0 %v902
    %v904 = vand.u32 %v40, 4294901760
    %v905 = vsub.f32 %v40, %v904
    %906 = vmatpush.msra.mxu0 %v905
    %v907 = vand.u32 %v39, 4294901760
    %v908 = vsub.f32 %v39, %v907
    %909 = vmatpush.msra.mxu0 %v908
    %v910 = vand.u32 %v38, 4294901760
    %v911 = vsub.f32 %v38, %v910
    %912 = vmatpush.msra.mxu0 %v911
    %v913 = vand.u32 %v37, 4294901760
    %v914 = vsub.f32 %v37, %v913
    %915 = vmatpush.msra.mxu0 %v914
    %v916 = vand.u32 %v36, 4294901760
    %v917 = vsub.f32 %v36, %v916
    %918 = vmatpush.msra.mxu0 %v917
    %v919 = vand.u32 %v35, 4294901760
    %v920 = vsub.f32 %v35, %v919
    %921 = vmatpush.msra.mxu0 %v920
    %v922 = vand.u32 %v34, 4294901760
    %v923 = vsub.f32 %v34, %v922
    %924 = vmatpush.msra.mxu0 %v923
    %v925 = vand.u32 %v33, 4294901760
    %v926 = vsub.f32 %v33, %v925
    %927 = vmatpush.msra.mxu0 %v926
    %v928 = vand.u32 %v32, 4294901760
    %v929 = vsub.f32 %v32, %v928
    %930 = vmatpush.msra.mxu0 %v929
    %v931 = vand.u32 %v31, 4294901760
    %v932 = vsub.f32 %v31, %v931
    %933 = vmatpush.msra.mxu0 %v932
    %v934 = vand.u32 %v743, 4294901760
    %v935 = vsub.f32 %v743, %v934
    %936 = vmatmul.f32.gmra.mxu0 %v935
    %v937 = vpop.f32.mrf.mxu0
    %v938 = vadd.f32 %v884, %v937
    %939 = vdwg.mxu0
    %v940 = vand.u32 %v46, 4294901760
    %941 = vmatpush.msra.mxu0 %v940
    %v942 = vand.u32 %v45, 4294901760
    %943 = vmatpush.msra.mxu0 %v942
    %v944 = vand.u32 %v44, 4294901760
    %945 = vmatpush.msra.mxu0 %v944
    %v946 = vand.u32 %v43, 4294901760
    %947 = vmatpush.msra.mxu0 %v946
    %v948 = vand.u32 %v42, 4294901760
    %949 = vmatpush.msra.mxu0 %v948
    %v950 = vand.u32 %v41, 4294901760
    %951 = vmatpush.msra.mxu0 %v950
    %v952 = vand.u32 %v40, 4294901760
    %953 = vmatpush.msra.mxu0 %v952
    %v954 = vand.u32 %v39, 4294901760
    %955 = vmatpush.msra.mxu0 %v954
    %v956 = vand.u32 %v38, 4294901760
    %957 = vmatpush.msra.mxu0 %v956
    %v958 = vand.u32 %v37, 4294901760
    %959 = vmatpush.msra.mxu0 %v958
    %v960 = vand.u32 %v36, 4294901760
    %961 = vmatpush.msra.mxu0 %v960
    %v962 = vand.u32 %v35, 4294901760
    %963 = vmatpush.msra.mxu0 %v962
    %v964 = vand.u32 %v34, 4294901760
    %965 = vmatpush.msra.mxu0 %v964
    %v966 = vand.u32 %v33, 4294901760
    %967 = vmatpush.msra.mxu0 %v966
    %v968 = vand.u32 %v32, 4294901760
    %969 = vmatpush.msra.mxu0 %v968
    %v970 = vand.u32 %v31, 4294901760
    %971 = vmatpush.msra.mxu0 %v970
    %v972 = vand.u32 %v743, 4294901760
    %v973 = vsub.f32 %v743, %v972
    %v974 = vand.u32 %v973, 4294901760
    %975 = vmatmul.f32.gmra.mxu0 %v974
    %v976 = vpop.f32.mrf.mxu0
    %v977 = vadd.f32 %v938, %v976
    %978 = vdwg.mxu0
    %v979 = vand.u32 %v46, 4294901760
    %v980 = vsub.f32 %v46, %v979
    %v981 = vand.u32 %v980, 4294901760
    %982 = vmatpush.msra.mxu0 %v981
    %v983 = vand.u32 %v45, 4294901760
    %v984 = vsub.f32 %v45, %v983
    %v985 = vand.u32 %v984, 4294901760
    %986 = vmatpush.msra.mxu0 %v985
    %v987 = vand.u32 %v44, 4294901760
    %v988 = vsub.f32 %v44, %v987
    %v989 = vand.u32 %v988, 4294901760
    %990 = vmatpush.msra.mxu0 %v989
    %v991 = vand.u32 %v43, 4294901760
    %v992 = vsub.f32 %v43, %v991
    %v993 = vand.u32 %v992, 4294901760
    %994 = vmatpush.msra.mxu0 %v993
    %v995 = vand.u32 %v42, 4294901760
    %v996 = vsub.f32 %v42, %v995
    %v997 = vand.u32 %v996, 4294901760
    %998 = vmatpush.msra.mxu0 %v997
    %v999 = vand.u32 %v41, 4294901760
    %v1000 = vsub.f32 %v41, %v999
    %v1001 = vand.u32 %v1000, 4294901760
    %1002 = vmatpush.msra.mxu0 %v1001
    %v1003 = vand.u32 %v40, 4294901760
    %v1004 = vsub.f32 %v40, %v1003
    %v1005 = vand.u32 %v1004, 4294901760
    %1006 = vmatpush.msra.mxu0 %v1005
    %v1007 = vand.u32 %v39, 4294901760
    %v1008 = vsub.f32 %v39, %v1007
    %v1009 = vand.u32 %v1008, 4294901760
    %1010 = vmatpush.msra.mxu0 %v1009
    %v1011 = vand.u32 %v38, 4294901760
    %v1012 = vsub.f32 %v38, %v1011
    %v1013 = vand.u32 %v1012, 4294901760
    %1014 = vmatpush.msra.mxu0 %v1013
    %v1015 = vand.u32 %v37, 4294901760
    %v1016 = vsub.f32 %v37, %v1015
    %v1017 = vand.u32 %v1016, 4294901760
    %1018 = vmatpush.msra.mxu0 %v1017
    %v1019 = vand.u32 %v36, 4294901760
    %v1020 = vsub.f32 %v36, %v1019
    %v1021 = vand.u32 %v1020, 4294901760
    %1022 = vmatpush.msra.mxu0 %v1021
    %v1023 = vand.u32 %v35, 4294901760
    %v1024 = vsub.f32 %v35, %v1023
    %v1025 = vand.u32 %v1024, 4294901760
    %1026 = vmatpush.msra.mxu0 %v1025
    %v1027 = vand.u32 %v34, 4294901760
    %v1028 = vsub.f32 %v34, %v1027
    %v1029 = vand.u32 %v1028, 4294901760
    %1030 = vmatpush.msra.mxu0 %v1029
    %v1031 = vand.u32 %v33, 4294901760
    %v1032 = vsub.f32 %v33, %v1031
    %v1033 = vand.u32 %v1032, 4294901760
    %1034 = vmatpush.msra.mxu0 %v1033
    %v1035 = vand.u32 %v32, 4294901760
    %v1036 = vsub.f32 %v32, %v1035
    %v1037 = vand.u32 %v1036, 4294901760
    %1038 = vmatpush.msra.mxu0 %v1037
    %v1039 = vand.u32 %v31, 4294901760
    %v1040 = vsub.f32 %v31, %v1039
    %v1041 = vand.u32 %v1040, 4294901760
    %1042 = vmatpush.msra.mxu0 %v1041
    %v1043 = vand.u32 %v743, 4294901760
    %1044 = vmatmul.f32.gmra.mxu0 %v1043
    %v1045 = vpop.f32.mrf.mxu0
    %v1046 = vadd.f32 %v977, %v1045
    %1047 = vdwg.mxu0
    %v1048 = vand.u32 %v46, 4294901760
    %1049 = vmatpush.msra.mxu0 %v1048
    %v1050 = vand.u32 %v45, 4294901760
    %1051 = vmatpush.msra.mxu0 %v1050
    %v1052 = vand.u32 %v44, 4294901760
    %1053 = vmatpush.msra.mxu0 %v1052
    %v1054 = vand.u32 %v43, 4294901760
    %1055 = vmatpush.msra.mxu0 %v1054
    %v1056 = vand.u32 %v42, 4294901760
    %1057 = vmatpush.msra.mxu0 %v1056
    %v1058 = vand.u32 %v41, 4294901760
    %1059 = vmatpush.msra.mxu0 %v1058
    %v1060 = vand.u32 %v40, 4294901760
    %1061 = vmatpush.msra.mxu0 %v1060
    %v1062 = vand.u32 %v39, 4294901760
    %1063 = vmatpush.msra.mxu0 %v1062
    %v1064 = vand.u32 %v38, 4294901760
    %1065 = vmatpush.msra.mxu0 %v1064
    %v1066 = vand.u32 %v37, 4294901760
    %1067 = vmatpush.msra.mxu0 %v1066
    %v1068 = vand.u32 %v36, 4294901760
    %1069 = vmatpush.msra.mxu0 %v1068
    %v1070 = vand.u32 %v35, 4294901760
    %1071 = vmatpush.msra.mxu0 %v1070
    %v1072 = vand.u32 %v34, 4294901760
    %1073 = vmatpush.msra.mxu0 %v1072
    %v1074 = vand.u32 %v33, 4294901760
    %1075 = vmatpush.msra.mxu0 %v1074
    %v1076 = vand.u32 %v32, 4294901760
    %1077 = vmatpush.msra.mxu0 %v1076
    %v1078 = vand.u32 %v31, 4294901760
    %1079 = vmatpush.msra.mxu0 %v1078
    %v1080 = vand.u32 %v743, 4294901760
    %1081 = vmatmul.f32.gmra.mxu0 %v1080
    %v1082 = vpop.f32.mrf.mxu0
    %v1083 = vadd.f32 %v1046, %v1082
    %1084 = vdwg.mxu0
    %v1085 = vperm.slane %v47, 3
    %v1086 = vadd.f32 %v1085, %v1083
    %v1087 = vperm.slane %v29, 1
    %v1088 = vsub.f32 %v26, %v1087
    %v1089 = vsub.f32 %v24, %v1087
    %v1090 = vmul.f32 %v1088, %v1088
    %v1091 = vperm.slane %v29, 7
    %v1092 = vmul.f32 %v1090, %v1091
    %v1093 = vand.u32 %v46, 4294901760
    %1094 = vmatpush.msra.mxu0 %v1093
    %v1095 = vand.u32 %v45, 4294901760
    %1096 = vmatpush.msra.mxu0 %v1095
    %v1097 = vand.u32 %v44, 4294901760
    %1098 = vmatpush.msra.mxu0 %v1097
    %v1099 = vand.u32 %v43, 4294901760
    %1100 = vmatpush.msra.mxu0 %v1099
    %v1101 = vand.u32 %v42, 4294901760
    %1102 = vmatpush.msra.mxu0 %v1101
    %v1103 = vand.u32 %v41, 4294901760
    %1104 = vmatpush.msra.mxu0 %v1103
    %v1105 = vand.u32 %v40, 4294901760
    %1106 = vmatpush.msra.mxu0 %v1105
    %v1107 = vand.u32 %v39, 4294901760
    %1108 = vmatpush.msra.mxu0 %v1107
    %v1109 = vand.u32 %v38, 4294901760
    %1110 = vmatpush.msra.mxu0 %v1109
    %v1111 = vand.u32 %v37, 4294901760
    %1112 = vmatpush.msra.mxu0 %v1111
    %v1113 = vand.u32 %v36, 4294901760
    %1114 = vmatpush.msra.mxu0 %v1113
    %v1115 = vand.u32 %v35, 4294901760
    %1116 = vmatpush.msra.mxu0 %v1115
    %v1117 = vand.u32 %v34, 4294901760
    %1118 = vmatpush.msra.mxu0 %v1117
    %v1119 = vand.u32 %v33, 4294901760
    %1120 = vmatpush.msra.mxu0 %v1119
    %v1121 = vand.u32 %v32, 4294901760
    %1122 = vmatpush.msra.mxu0 %v1121
    %v1123 = vand.u32 %v31, 4294901760
    %1124 = vmatpush.msra.mxu0 %v1123
    %v1125 = vand.u32 %v1092, 4294901760
    %v1126 = vsub.f32 %v1092, %v1125
    %v1127 = vand.u32 %v1126, 4294901760
    %v1128 = vsub.f32 %v1126, %v1127
    %v1129 = vand.u32 %v1128, 4294901760
    %1130 = vmatmul.f32.gmra.mxu0 %v1129
    %v1131 = vpop.f32.mrf.mxu0
    %v1132 = vadd.f32 0.0, %v1131
    %1133 = vdwg.mxu0
    %v1134 = vand.u32 %v46, 4294901760
    %v1135 = vsub.f32 %v46, %v1134
    %v1136 = vand.u32 %v1135, 4294901760
    %v1137 = vsub.f32 %v1135, %v1136
    %v1138 = vand.u32 %v1137, 4294901760
    %1139 = vmatpush.msra.mxu0 %v1138
    %v1140 = vand.u32 %v45, 4294901760
    %v1141 = vsub.f32 %v45, %v1140
    %v1142 = vand.u32 %v1141, 4294901760
    %v1143 = vsub.f32 %v1141, %v1142
    %v1144 = vand.u32 %v1143, 4294901760
    %1145 = vmatpush.msra.mxu0 %v1144
    %v1146 = vand.u32 %v44, 4294901760
    %v1147 = vsub.f32 %v44, %v1146
    %v1148 = vand.u32 %v1147, 4294901760
    %v1149 = vsub.f32 %v1147, %v1148
    %v1150 = vand.u32 %v1149, 4294901760
    %1151 = vmatpush.msra.mxu0 %v1150
    %v1152 = vand.u32 %v43, 4294901760
    %v1153 = vsub.f32 %v43, %v1152
    %v1154 = vand.u32 %v1153, 4294901760
    %v1155 = vsub.f32 %v1153, %v1154
    %v1156 = vand.u32 %v1155, 4294901760
    %1157 = vmatpush.msra.mxu0 %v1156
    %v1158 = vand.u32 %v42, 4294901760
    %v1159 = vsub.f32 %v42, %v1158
    %v1160 = vand.u32 %v1159, 4294901760
    %v1161 = vsub.f32 %v1159, %v1160
    %v1162 = vand.u32 %v1161, 4294901760
    %1163 = vmatpush.msra.mxu0 %v1162
    %v1164 = vand.u32 %v41, 4294901760
    %v1165 = vsub.f32 %v41, %v1164
    %v1166 = vand.u32 %v1165, 4294901760
    %v1167 = vsub.f32 %v1165, %v1166
    %v1168 = vand.u32 %v1167, 4294901760
    %1169 = vmatpush.msra.mxu0 %v1168
    %v1170 = vand.u32 %v40, 4294901760
    %v1171 = vsub.f32 %v40, %v1170
    %v1172 = vand.u32 %v1171, 4294901760
    %v1173 = vsub.f32 %v1171, %v1172
    %v1174 = vand.u32 %v1173, 4294901760
    %1175 = vmatpush.msra.mxu0 %v1174
    %v1176 = vand.u32 %v39, 4294901760
    %v1177 = vsub.f32 %v39, %v1176
    %v1178 = vand.u32 %v1177, 4294901760
    %v1179 = vsub.f32 %v1177, %v1178
    %v1180 = vand.u32 %v1179, 4294901760
    %1181 = vmatpush.msra.mxu0 %v1180
    %v1182 = vand.u32 %v38, 4294901760
    %v1183 = vsub.f32 %v38, %v1182
    %v1184 = vand.u32 %v1183, 4294901760
    %v1185 = vsub.f32 %v1183, %v1184
    %v1186 = vand.u32 %v1185, 4294901760
    %1187 = vmatpush.msra.mxu0 %v1186
    %v1188 = vand.u32 %v37, 4294901760
    %v1189 = vsub.f32 %v37, %v1188
    %v1190 = vand.u32 %v1189, 4294901760
    %v1191 = vsub.f32 %v1189, %v1190
    %v1192 = vand.u32 %v1191, 4294901760
    %1193 = vmatpush.msra.mxu0 %v1192
    %v1194 = vand.u32 %v36, 4294901760
    %v1195 = vsub.f32 %v36, %v1194
    %v1196 = vand.u32 %v1195, 4294901760
    %v1197 = vsub.f32 %v1195, %v1196
    %v1198 = vand.u32 %v1197, 4294901760
    %1199 = vmatpush.msra.mxu0 %v1198
    %v1200 = vand.u32 %v35, 4294901760
    %v1201 = vsub.f32 %v35, %v1200
    %v1202 = vand.u32 %v1201, 4294901760
    %v1203 = vsub.f32 %v1201, %v1202
    %v1204 = vand.u32 %v1203, 4294901760
    %1205 = vmatpush.msra.mxu0 %v1204
    %v1206 = vand.u32 %v34, 4294901760
    %v1207 = vsub.f32 %v34, %v1206
    %v1208 = vand.u32 %v1207, 4294901760
    %v1209 = vsub.f32 %v1207, %v1208
    %v1210 = vand.u32 %v1209, 4294901760
    %1211 = vmatpush.msra.mxu0 %v1210
    %v1212 = vand.u32 %v33, 4294901760
    %v1213 = vsub.f32 %v33, %v1212
    %v1214 = vand.u32 %v1213, 4294901760
    %v1215 = vsub.f32 %v1213, %v1214
    %v1216 = vand.u32 %v1215, 4294901760
    %1217 = vmatpush.msra.mxu0 %v1216
    %v1218 = vand.u32 %v32, 4294901760
    %v1219 = vsub.f32 %v32, %v1218
    %v1220 = vand.u32 %v1219, 4294901760
    %v1221 = vsub.f32 %v1219, %v1220
    %v1222 = vand.u32 %v1221, 4294901760
    %1223 = vmatpush.msra.mxu0 %v1222
    %v1224 = vand.u32 %v31, 4294901760
    %v1225 = vsub.f32 %v31, %v1224
    %v1226 = vand.u32 %v1225, 4294901760
    %v1227 = vsub.f32 %v1225, %v1226
    %v1228 = vand.u32 %v1227, 4294901760
    %1229 = vmatpush.msra.mxu0 %v1228
    %v1230 = vand.u32 %v1092, 4294901760
    %1231 = vmatmul.f32.gmra.mxu0 %v1230
    %v1232 = vpop.f32.mrf.mxu0
    %v1233 = vadd.f32 %v1132, %v1232
    %1234 = vdwg.mxu0
    %v1235 = vand.u32 %v46, 4294901760
    %v1236 = vsub.f32 %v46, %v1235
    %1237 = vmatpush.msra.mxu0 %v1236
    %v1238 = vand.u32 %v45, 4294901760
    %v1239 = vsub.f32 %v45, %v1238
    %1240 = vmatpush.msra.mxu0 %v1239
    %v1241 = vand.u32 %v44, 4294901760
    %v1242 = vsub.f32 %v44, %v1241
    %1243 = vmatpush.msra.mxu0 %v1242
    %v1244 = vand.u32 %v43, 4294901760
    %v1245 = vsub.f32 %v43, %v1244
    %1246 = vmatpush.msra.mxu0 %v1245
    %v1247 = vand.u32 %v42, 4294901760
    %v1248 = vsub.f32 %v42, %v1247
    %1249 = vmatpush.msra.mxu0 %v1248
    %v1250 = vand.u32 %v41, 4294901760
    %v1251 = vsub.f32 %v41, %v1250
    %1252 = vmatpush.msra.mxu0 %v1251
    %v1253 = vand.u32 %v40, 4294901760
    %v1254 = vsub.f32 %v40, %v1253
    %1255 = vmatpush.msra.mxu0 %v1254
    %v1256 = vand.u32 %v39, 4294901760
    %v1257 = vsub.f32 %v39, %v1256
    %1258 = vmatpush.msra.mxu0 %v1257
    %v1259 = vand.u32 %v38, 4294901760
    %v1260 = vsub.f32 %v38, %v1259
    %1261 = vmatpush.msra.mxu0 %v1260
    %v1262 = vand.u32 %v37, 4294901760
    %v1263 = vsub.f32 %v37, %v1262
    %1264 = vmatpush.msra.mxu0 %v1263
    %v1265 = vand.u32 %v36, 4294901760
    %v1266 = vsub.f32 %v36, %v1265
    %1267 = vmatpush.msra.mxu0 %v1266
    %v1268 = vand.u32 %v35, 4294901760
    %v1269 = vsub.f32 %v35, %v1268
    %1270 = vmatpush.msra.mxu0 %v1269
    %v1271 = vand.u32 %v34, 4294901760
    %v1272 = vsub.f32 %v34, %v1271
    %1273 = vmatpush.msra.mxu0 %v1272
    %v1274 = vand.u32 %v33, 4294901760
    %v1275 = vsub.f32 %v33, %v1274
    %1276 = vmatpush.msra.mxu0 %v1275
    %v1277 = vand.u32 %v32, 4294901760
    %v1278 = vsub.f32 %v32, %v1277
    %1279 = vmatpush.msra.mxu0 %v1278
    %v1280 = vand.u32 %v31, 4294901760
    %v1281 = vsub.f32 %v31, %v1280
    %1282 = vmatpush.msra.mxu0 %v1281
    %v1283 = vand.u32 %v1092, 4294901760
    %v1284 = vsub.f32 %v1092, %v1283
    %1285 = vmatmul.f32.gmra.mxu0 %v1284
    %v1286 = vpop.f32.mrf.mxu0
    %v1287 = vadd.f32 %v1233, %v1286
    %1288 = vdwg.mxu0
    %v1289 = vand.u32 %v46, 4294901760
    %1290 = vmatpush.msra.mxu0 %v1289
    %v1291 = vand.u32 %v45, 4294901760
    %1292 = vmatpush.msra.mxu0 %v1291
    %v1293 = vand.u32 %v44, 4294901760
    %1294 = vmatpush.msra.mxu0 %v1293
    %v1295 = vand.u32 %v43, 4294901760
    %1296 = vmatpush.msra.mxu0 %v1295
    %v1297 = vand.u32 %v42, 4294901760
    %1298 = vmatpush.msra.mxu0 %v1297
    %v1299 = vand.u32 %v41, 4294901760
    %1300 = vmatpush.msra.mxu0 %v1299
    %v1301 = vand.u32 %v40, 4294901760
    %1302 = vmatpush.msra.mxu0 %v1301
    %v1303 = vand.u32 %v39, 4294901760
    %1304 = vmatpush.msra.mxu0 %v1303
    %v1305 = vand.u32 %v38, 4294901760
    %1306 = vmatpush.msra.mxu0 %v1305
    %v1307 = vand.u32 %v37, 4294901760
    %1308 = vmatpush.msra.mxu0 %v1307
    %v1309 = vand.u32 %v36, 4294901760
    %1310 = vmatpush.msra.mxu0 %v1309
    %v1311 = vand.u32 %v35, 4294901760
    %1312 = vmatpush.msra.mxu0 %v1311
    %v1313 = vand.u32 %v34, 4294901760
    %1314 = vmatpush.msra.mxu0 %v1313
    %v1315 = vand.u32 %v33, 4294901760
    %1316 = vmatpush.msra.mxu0 %v1315
    %v1317 = vand.u32 %v32, 4294901760
    %1318 = vmatpush.msra.mxu0 %v1317
    %v1319 = vand.u32 %v31, 4294901760
    %1320 = vmatpush.msra.mxu0 %v1319
    %v1321 = vand.u32 %v1092, 4294901760
    %v1322 = vsub.f32 %v1092, %v1321
    %v1323 = vand.u32 %v1322, 4294901760
    %1324 = vmatmul.f32.gmra.mxu0 %v1323
    %v1325 = vpop.f32.mrf.mxu0
    %v1326 = vadd.f32 %v1287, %v1325
    %1327 = vdwg.mxu0
    %v1328 = vand.u32 %v46, 4294901760
    %v1329 = vsub.f32 %v46, %v1328
    %v1330 = vand.u32 %v1329, 4294901760
    %1331 = vmatpush.msra.mxu0 %v1330
    %v1332 = vand.u32 %v45, 4294901760
    %v1333 = vsub.f32 %v45, %v1332
    %v1334 = vand.u32 %v1333, 4294901760
    %1335 = vmatpush.msra.mxu0 %v1334
    %v1336 = vand.u32 %v44, 4294901760
    %v1337 = vsub.f32 %v44, %v1336
    %v1338 = vand.u32 %v1337, 4294901760
    %1339 = vmatpush.msra.mxu0 %v1338
    %v1340 = vand.u32 %v43, 4294901760
    %v1341 = vsub.f32 %v43, %v1340
    %v1342 = vand.u32 %v1341, 4294901760
    %1343 = vmatpush.msra.mxu0 %v1342
    %v1344 = vand.u32 %v42, 4294901760
    %v1345 = vsub.f32 %v42, %v1344
    %v1346 = vand.u32 %v1345, 4294901760
    %1347 = vmatpush.msra.mxu0 %v1346
    %v1348 = vand.u32 %v41, 4294901760
    %v1349 = vsub.f32 %v41, %v1348
    %v1350 = vand.u32 %v1349, 4294901760
    %1351 = vmatpush.msra.mxu0 %v1350
    %v1352 = vand.u32 %v40, 4294901760
    %v1353 = vsub.f32 %v40, %v1352
    %v1354 = vand.u32 %v1353, 4294901760
    %1355 = vmatpush.msra.mxu0 %v1354
    %v1356 = vand.u32 %v39, 4294901760
    %v1357 = vsub.f32 %v39, %v1356
    %v1358 = vand.u32 %v1357, 4294901760
    %1359 = vmatpush.msra.mxu0 %v1358
    %v1360 = vand.u32 %v38, 4294901760
    %v1361 = vsub.f32 %v38, %v1360
    %v1362 = vand.u32 %v1361, 4294901760
    %1363 = vmatpush.msra.mxu0 %v1362
    %v1364 = vand.u32 %v37, 4294901760
    %v1365 = vsub.f32 %v37, %v1364
    %v1366 = vand.u32 %v1365, 4294901760
    %1367 = vmatpush.msra.mxu0 %v1366
    %v1368 = vand.u32 %v36, 4294901760
    %v1369 = vsub.f32 %v36, %v1368
    %v1370 = vand.u32 %v1369, 4294901760
    %1371 = vmatpush.msra.mxu0 %v1370
    %v1372 = vand.u32 %v35, 4294901760
    %v1373 = vsub.f32 %v35, %v1372
    %v1374 = vand.u32 %v1373, 4294901760
    %1375 = vmatpush.msra.mxu0 %v1374
    %v1376 = vand.u32 %v34, 4294901760
    %v1377 = vsub.f32 %v34, %v1376
    %v1378 = vand.u32 %v1377, 4294901760
    %1379 = vmatpush.msra.mxu0 %v1378
    %v1380 = vand.u32 %v33, 4294901760
    %v1381 = vsub.f32 %v33, %v1380
    %v1382 = vand.u32 %v1381, 4294901760
    %1383 = vmatpush.msra.mxu0 %v1382
    %v1384 = vand.u32 %v32, 4294901760
    %v1385 = vsub.f32 %v32, %v1384
    %v1386 = vand.u32 %v1385, 4294901760
    %1387 = vmatpush.msra.mxu0 %v1386
    %v1388 = vand.u32 %v31, 4294901760
    %v1389 = vsub.f32 %v31, %v1388
    %v1390 = vand.u32 %v1389, 4294901760
    %1391 = vmatpush.msra.mxu0 %v1390
    %v1392 = vand.u32 %v1092, 4294901760
    %1393 = vmatmul.f32.gmra.mxu0 %v1392
    %v1394 = vpop.f32.mrf.mxu0
    %v1395 = vadd.f32 %v1326, %v1394
    %1396 = vdwg.mxu0
    %v1397 = vand.u32 %v46, 4294901760
    %1398 = vmatpush.msra.mxu0 %v1397
    %v1399 = vand.u32 %v45, 4294901760
    %1400 = vmatpush.msra.mxu0 %v1399
    %v1401 = vand.u32 %v44, 4294901760
    %1402 = vmatpush.msra.mxu0 %v1401
    %v1403 = vand.u32 %v43, 4294901760
    %1404 = vmatpush.msra.mxu0 %v1403
    %v1405 = vand.u32 %v42, 4294901760
    %1406 = vmatpush.msra.mxu0 %v1405
    %v1407 = vand.u32 %v41, 4294901760
    %1408 = vmatpush.msra.mxu0 %v1407
    %v1409 = vand.u32 %v40, 4294901760
    %1410 = vmatpush.msra.mxu0 %v1409
    %v1411 = vand.u32 %v39, 4294901760
    %1412 = vmatpush.msra.mxu0 %v1411
    %v1413 = vand.u32 %v38, 4294901760
    %1414 = vmatpush.msra.mxu0 %v1413
    %v1415 = vand.u32 %v37, 4294901760
    %1416 = vmatpush.msra.mxu0 %v1415
    %v1417 = vand.u32 %v36, 4294901760
    %1418 = vmatpush.msra.mxu0 %v1417
    %v1419 = vand.u32 %v35, 4294901760
    %1420 = vmatpush.msra.mxu0 %v1419
    %v1421 = vand.u32 %v34, 4294901760
    %1422 = vmatpush.msra.mxu0 %v1421
    %v1423 = vand.u32 %v33, 4294901760
    %1424 = vmatpush.msra.mxu0 %v1423
    %v1425 = vand.u32 %v32, 4294901760
    %1426 = vmatpush.msra.mxu0 %v1425
    %v1427 = vand.u32 %v31, 4294901760
    %1428 = vmatpush.msra.mxu0 %v1427
    %v1429 = vand.u32 %v1092, 4294901760
    %1430 = vmatmul.f32.gmra.mxu0 %v1429
    %v1431 = vpop.f32.mrf.mxu0
    %v1432 = vadd.f32 %v1395, %v1431
    %1433 = vdwg.mxu0
    %v1434 = vperm.slane %v47, 1
    %v1435 = vsub.f32 %v1434, %v1432
    %v1436 = vmul.f32 %v1089, %v1089
    %v1437 = vadd.f32 %v28, %v1436
    %v1438 = vperm.slane %v29, 4
    %v1439 = vmul.f32 %v1437, %v1438
    %v1440 = vand.u32 %v46, 4294901760
    %1441 = vmatpush.msra.mxu0 %v1440
    %v1442 = vand.u32 %v45, 4294901760
    %1443 = vmatpush.msra.mxu0 %v1442
    %v1444 = vand.u32 %v44, 4294901760
    %1445 = vmatpush.msra.mxu0 %v1444
    %v1446 = vand.u32 %v43, 4294901760
    %1447 = vmatpush.msra.mxu0 %v1446
    %v1448 = vand.u32 %v42, 4294901760
    %1449 = vmatpush.msra.mxu0 %v1448
    %v1450 = vand.u32 %v41, 4294901760
    %1451 = vmatpush.msra.mxu0 %v1450
    %v1452 = vand.u32 %v40, 4294901760
    %1453 = vmatpush.msra.mxu0 %v1452
    %v1454 = vand.u32 %v39, 4294901760
    %1455 = vmatpush.msra.mxu0 %v1454
    %v1456 = vand.u32 %v38, 4294901760
    %1457 = vmatpush.msra.mxu0 %v1456
    %v1458 = vand.u32 %v37, 4294901760
    %1459 = vmatpush.msra.mxu0 %v1458
    %v1460 = vand.u32 %v36, 4294901760
    %1461 = vmatpush.msra.mxu0 %v1460
    %v1462 = vand.u32 %v35, 4294901760
    %1463 = vmatpush.msra.mxu0 %v1462
    %v1464 = vand.u32 %v34, 4294901760
    %1465 = vmatpush.msra.mxu0 %v1464
    %v1466 = vand.u32 %v33, 4294901760
    %1467 = vmatpush.msra.mxu0 %v1466
    %v1468 = vand.u32 %v32, 4294901760
    %1469 = vmatpush.msra.mxu0 %v1468
    %v1470 = vand.u32 %v31, 4294901760
    %1471 = vmatpush.msra.mxu0 %v1470
    %v1472 = vand.u32 %v1439, 4294901760
    %v1473 = vsub.f32 %v1439, %v1472
    %v1474 = vand.u32 %v1473, 4294901760
    %v1475 = vsub.f32 %v1473, %v1474
    %v1476 = vand.u32 %v1475, 4294901760
    %1477 = vmatmul.f32.gmra.mxu0 %v1476
    %v1478 = vpop.f32.mrf.mxu0
    %v1479 = vadd.f32 0.0, %v1478
    %1480 = vdwg.mxu0
    %v1481 = vand.u32 %v46, 4294901760
    %v1482 = vsub.f32 %v46, %v1481
    %v1483 = vand.u32 %v1482, 4294901760
    %v1484 = vsub.f32 %v1482, %v1483
    %v1485 = vand.u32 %v1484, 4294901760
    %1486 = vmatpush.msra.mxu0 %v1485
    %v1487 = vand.u32 %v45, 4294901760
    %v1488 = vsub.f32 %v45, %v1487
    %v1489 = vand.u32 %v1488, 4294901760
    %v1490 = vsub.f32 %v1488, %v1489
    %v1491 = vand.u32 %v1490, 4294901760
    %1492 = vmatpush.msra.mxu0 %v1491
    %v1493 = vand.u32 %v44, 4294901760
    %v1494 = vsub.f32 %v44, %v1493
    %v1495 = vand.u32 %v1494, 4294901760
    %v1496 = vsub.f32 %v1494, %v1495
    %v1497 = vand.u32 %v1496, 4294901760
    %1498 = vmatpush.msra.mxu0 %v1497
    %v1499 = vand.u32 %v43, 4294901760
    %v1500 = vsub.f32 %v43, %v1499
    %v1501 = vand.u32 %v1500, 4294901760
    %v1502 = vsub.f32 %v1500, %v1501
    %v1503 = vand.u32 %v1502, 4294901760
    %1504 = vmatpush.msra.mxu0 %v1503
    %v1505 = vand.u32 %v42, 4294901760
    %v1506 = vsub.f32 %v42, %v1505
    %v1507 = vand.u32 %v1506, 4294901760
    %v1508 = vsub.f32 %v1506, %v1507
    %v1509 = vand.u32 %v1508, 4294901760
    %1510 = vmatpush.msra.mxu0 %v1509
    %v1511 = vand.u32 %v41, 4294901760
    %v1512 = vsub.f32 %v41, %v1511
    %v1513 = vand.u32 %v1512, 4294901760
    %v1514 = vsub.f32 %v1512, %v1513
    %v1515 = vand.u32 %v1514, 4294901760
    %1516 = vmatpush.msra.mxu0 %v1515
    %v1517 = vand.u32 %v40, 4294901760
    %v1518 = vsub.f32 %v40, %v1517
    %v1519 = vand.u32 %v1518, 4294901760
    %v1520 = vsub.f32 %v1518, %v1519
    %v1521 = vand.u32 %v1520, 4294901760
    %1522 = vmatpush.msra.mxu0 %v1521
    %v1523 = vand.u32 %v39, 4294901760
    %v1524 = vsub.f32 %v39, %v1523
    %v1525 = vand.u32 %v1524, 4294901760
    %v1526 = vsub.f32 %v1524, %v1525
    %v1527 = vand.u32 %v1526, 4294901760
    %1528 = vmatpush.msra.mxu0 %v1527
    %v1529 = vand.u32 %v38, 4294901760
    %v1530 = vsub.f32 %v38, %v1529
    %v1531 = vand.u32 %v1530, 4294901760
    %v1532 = vsub.f32 %v1530, %v1531
    %v1533 = vand.u32 %v1532, 4294901760
    %1534 = vmatpush.msra.mxu0 %v1533
    %v1535 = vand.u32 %v37, 4294901760
    %v1536 = vsub.f32 %v37, %v1535
    %v1537 = vand.u32 %v1536, 4294901760
    %v1538 = vsub.f32 %v1536, %v1537
    %v1539 = vand.u32 %v1538, 4294901760
    %1540 = vmatpush.msra.mxu0 %v1539
    %v1541 = vand.u32 %v36, 4294901760
    %v1542 = vsub.f32 %v36, %v1541
    %v1543 = vand.u32 %v1542, 4294901760
    %v1544 = vsub.f32 %v1542, %v1543
    %v1545 = vand.u32 %v1544, 4294901760
    %1546 = vmatpush.msra.mxu0 %v1545
    %v1547 = vand.u32 %v35, 4294901760
    %v1548 = vsub.f32 %v35, %v1547
    %v1549 = vand.u32 %v1548, 4294901760
    %v1550 = vsub.f32 %v1548, %v1549
    %v1551 = vand.u32 %v1550, 4294901760
    %1552 = vmatpush.msra.mxu0 %v1551
    %v1553 = vand.u32 %v34, 4294901760
    %v1554 = vsub.f32 %v34, %v1553
    %v1555 = vand.u32 %v1554, 4294901760
    %v1556 = vsub.f32 %v1554, %v1555
    %v1557 = vand.u32 %v1556, 4294901760
    %1558 = vmatpush.msra.mxu0 %v1557
    %v1559 = vand.u32 %v33, 4294901760
    %v1560 = vsub.f32 %v33, %v1559
    %v1561 = vand.u32 %v1560, 4294901760
    %v1562 = vsub.f32 %v1560, %v1561
    %v1563 = vand.u32 %v1562, 4294901760
    %1564 = vmatpush.msra.mxu0 %v1563
    %v1565 = vand.u32 %v32, 4294901760
    %v1566 = vsub.f32 %v32, %v1565
    %v1567 = vand.u32 %v1566, 4294901760
    %v1568 = vsub.f32 %v1566, %v1567
    %v1569 = vand.u32 %v1568, 4294901760
    %1570 = vmatpush.msra.mxu0 %v1569
    %v1571 = vand.u32 %v31, 4294901760
    %v1572 = vsub.f32 %v31, %v1571
    %v1573 = vand.u32 %v1572, 4294901760
    %v1574 = vsub.f32 %v1572, %v1573
    %v1575 = vand.u32 %v1574, 4294901760
    %1576 = vmatpush.msra.mxu0 %v1575
    %v1577 = vand.u32 %v1439, 4294901760
    %1578 = vmatmul.f32.gmra.mxu0 %v1577
    %v1579 = vpop.f32.mrf.mxu0
    %v1580 = vadd.f32 %v1479, %v1579
    %1581 = vdwg.mxu0
    %v1582 = vand.u32 %v46, 4294901760
    %v1583 = vsub.f32 %v46, %v1582
    %1584 = vmatpush.msra.mxu0 %v1583
    %v1585 = vand.u32 %v45, 4294901760
    %v1586 = vsub.f32 %v45, %v1585
    %1587 = vmatpush.msra.mxu0 %v1586
    %v1588 = vand.u32 %v44, 4294901760
    %v1589 = vsub.f32 %v44, %v1588
    %1590 = vmatpush.msra.mxu0 %v1589
    %v1591 = vand.u32 %v43, 4294901760
    %v1592 = vsub.f32 %v43, %v1591
    %1593 = vmatpush.msra.mxu0 %v1592
    %v1594 = vand.u32 %v42, 4294901760
    %v1595 = vsub.f32 %v42, %v1594
    %1596 = vmatpush.msra.mxu0 %v1595
    %v1597 = vand.u32 %v41, 4294901760
    %v1598 = vsub.f32 %v41, %v1597
    %1599 = vmatpush.msra.mxu0 %v1598
    %v1600 = vand.u32 %v40, 4294901760
    %v1601 = vsub.f32 %v40, %v1600
    %1602 = vmatpush.msra.mxu0 %v1601
    %v1603 = vand.u32 %v39, 4294901760
    %v1604 = vsub.f32 %v39, %v1603
    %1605 = vmatpush.msra.mxu0 %v1604
    %v1606 = vand.u32 %v38, 4294901760
    %v1607 = vsub.f32 %v38, %v1606
    %1608 = vmatpush.msra.mxu0 %v1607
    %v1609 = vand.u32 %v37, 4294901760
    %v1610 = vsub.f32 %v37, %v1609
    %1611 = vmatpush.msra.mxu0 %v1610
    %v1612 = vand.u32 %v36, 4294901760
    %v1613 = vsub.f32 %v36, %v1612
    %1614 = vmatpush.msra.mxu0 %v1613
    %v1615 = vand.u32 %v35, 4294901760
    %v1616 = vsub.f32 %v35, %v1615
    %1617 = vmatpush.msra.mxu0 %v1616
    %v1618 = vand.u32 %v34, 4294901760
    %v1619 = vsub.f32 %v34, %v1618
    %1620 = vmatpush.msra.mxu0 %v1619
    %v1621 = vand.u32 %v33, 4294901760
    %v1622 = vsub.f32 %v33, %v1621
    %1623 = vmatpush.msra.mxu0 %v1622
    %v1624 = vand.u32 %v32, 4294901760
    %v1625 = vsub.f32 %v32, %v1624
    %1626 = vmatpush.msra.mxu0 %v1625
    %v1627 = vand.u32 %v31, 4294901760
    %v1628 = vsub.f32 %v31, %v1627
    %1629 = vmatpush.msra.mxu0 %v1628
    %v1630 = vand.u32 %v1439, 4294901760
    %v1631 = vsub.f32 %v1439, %v1630
    %1632 = vmatmul.f32.gmra.mxu0 %v1631
    %v1633 = vpop.f32.mrf.mxu0
    %v1634 = vadd.f32 %v1580, %v1633
    %1635 = vdwg.mxu0
    %v1636 = vand.u32 %v46, 4294901760
    %1637 = vmatpush.msra.mxu0 %v1636
    %v1638 = vand.u32 %v45, 4294901760
    %1639 = vmatpush.msra.mxu0 %v1638
    %v1640 = vand.u32 %v44, 4294901760
    %1641 = vmatpush.msra.mxu0 %v1640
    %v1642 = vand.u32 %v43, 4294901760
    %1643 = vmatpush.msra.mxu0 %v1642
    %v1644 = vand.u32 %v42, 4294901760
    %1645 = vmatpush.msra.mxu0 %v1644
    %v1646 = vand.u32 %v41, 4294901760
    %1647 = vmatpush.msra.mxu0 %v1646
    %v1648 = vand.u32 %v40, 4294901760
    %1649 = vmatpush.msra.mxu0 %v1648
    %v1650 = vand.u32 %v39, 4294901760
    %1651 = vmatpush.msra.mxu0 %v1650
    %v1652 = vand.u32 %v38, 4294901760
    %1653 = vmatpush.msra.mxu0 %v1652
    %v1654 = vand.u32 %v37, 4294901760
    %1655 = vmatpush.msra.mxu0 %v1654
    %v1656 = vand.u32 %v36, 4294901760
    %1657 = vmatpush.msra.mxu0 %v1656
    %v1658 = vand.u32 %v35, 4294901760
    %1659 = vmatpush.msra.mxu0 %v1658
    %v1660 = vand.u32 %v34, 4294901760
    %1661 = vmatpush.msra.mxu0 %v1660
    %v1662 = vand.u32 %v33, 4294901760
    %1663 = vmatpush.msra.mxu0 %v1662
    %v1664 = vand.u32 %v32, 4294901760
    %1665 = vmatpush.msra.mxu0 %v1664
    %v1666 = vand.u32 %v31, 4294901760
    %1667 = vmatpush.msra.mxu0 %v1666
    %v1668 = vand.u32 %v1439, 4294901760
    %v1669 = vsub.f32 %v1439, %v1668
    %v1670 = vand.u32 %v1669, 4294901760
    %1671 = vmatmul.f32.gmra.mxu0 %v1670
    %v1672 = vpop.f32.mrf.mxu0
    %v1673 = vadd.f32 %v1634, %v1672
    %1674 = vdwg.mxu0
    %v1675 = vand.u32 %v46, 4294901760
    %v1676 = vsub.f32 %v46, %v1675
    %v1677 = vand.u32 %v1676, 4294901760
    %1678 = vmatpush.msra.mxu0 %v1677
    %v1679 = vand.u32 %v45, 4294901760
    %v1680 = vsub.f32 %v45, %v1679
    %v1681 = vand.u32 %v1680, 4294901760
    %1682 = vmatpush.msra.mxu0 %v1681
    %v1683 = vand.u32 %v44, 4294901760
    %v1684 = vsub.f32 %v44, %v1683
    %v1685 = vand.u32 %v1684, 4294901760
    %1686 = vmatpush.msra.mxu0 %v1685
    %v1687 = vand.u32 %v43, 4294901760
    %v1688 = vsub.f32 %v43, %v1687
    %v1689 = vand.u32 %v1688, 4294901760
    %1690 = vmatpush.msra.mxu0 %v1689
    %v1691 = vand.u32 %v42, 4294901760
    %v1692 = vsub.f32 %v42, %v1691
    %v1693 = vand.u32 %v1692, 4294901760
    %1694 = vmatpush.msra.mxu0 %v1693
    %v1695 = vand.u32 %v41, 4294901760
    %v1696 = vsub.f32 %v41, %v1695
    %v1697 = vand.u32 %v1696, 4294901760
    %1698 = vmatpush.msra.mxu0 %v1697
    %v1699 = vand.u32 %v40, 4294901760
    %v1700 = vsub.f32 %v40, %v1699
    %v1701 = vand.u32 %v1700, 4294901760
    %1702 = vmatpush.msra.mxu0 %v1701
    %v1703 = vand.u32 %v39, 4294901760
    %v1704 = vsub.f32 %v39, %v1703
    %v1705 = vand.u32 %v1704, 4294901760
    %1706 = vmatpush.msra.mxu0 %v1705
    %v1707 = vand.u32 %v38, 4294901760
    %v1708 = vsub.f32 %v38, %v1707
    %v1709 = vand.u32 %v1708, 4294901760
    %1710 = vmatpush.msra.mxu0 %v1709
    %v1711 = vand.u32 %v37, 4294901760
    %v1712 = vsub.f32 %v37, %v1711
    %v1713 = vand.u32 %v1712, 4294901760
    %1714 = vmatpush.msra.mxu0 %v1713
    %v1715 = vand.u32 %v36, 4294901760
    %v1716 = vsub.f32 %v36, %v1715
    %v1717 = vand.u32 %v1716, 4294901760
    %1718 = vmatpush.msra.mxu0 %v1717
    %v1719 = vand.u32 %v35, 4294901760
    %v1720 = vsub.f32 %v35, %v1719
    %v1721 = vand.u32 %v1720, 4294901760
    %1722 = vmatpush.msra.mxu0 %v1721
    %v1723 = vand.u32 %v34, 4294901760
    %v1724 = vsub.f32 %v34, %v1723
    %v1725 = vand.u32 %v1724, 4294901760
    %1726 = vmatpush.msra.mxu0 %v1725
    %v1727 = vand.u32 %v33, 4294901760
    %v1728 = vsub.f32 %v33, %v1727
    %v1729 = vand.u32 %v1728, 4294901760
    %1730 = vmatpush.msra.mxu0 %v1729
    %v1731 = vand.u32 %v32, 4294901760
    %v1732 = vsub.f32 %v32, %v1731
    %v1733 = vand.u32 %v1732, 4294901760
    %1734 = vmatpush.msra.mxu0 %v1733
    %v1735 = vand.u32 %v31, 4294901760
    %v1736 = vsub.f32 %v31, %v1735
    %v1737 = vand.u32 %v1736, 4294901760
    %1738 = vmatpush.msra.mxu0 %v1737
    %v1739 = vand.u32 %v1439, 4294901760
    %1740 = vmatmul.f32.gmra.mxu0 %v1739
    %v1741 = vpop.f32.mrf.mxu0
    %v1742 = vadd.f32 %v1673, %v1741
    %1743 = vdwg.mxu0
    %v1744 = vand.u32 %v46, 4294901760
    %1745 = vmatpush.msra.mxu0 %v1744
    %v1746 = vand.u32 %v45, 4294901760
    %1747 = vmatpush.msra.mxu0 %v1746
    %v1748 = vand.u32 %v44, 4294901760
    %1749 = vmatpush.msra.mxu0 %v1748
    %v1750 = vand.u32 %v43, 4294901760
    %1751 = vmatpush.msra.mxu0 %v1750
    %v1752 = vand.u32 %v42, 4294901760
    %1753 = vmatpush.msra.mxu0 %v1752
    %v1754 = vand.u32 %v41, 4294901760
    %1755 = vmatpush.msra.mxu0 %v1754
    %v1756 = vand.u32 %v40, 4294901760
    %1757 = vmatpush.msra.mxu0 %v1756
    %v1758 = vand.u32 %v39, 4294901760
    %1759 = vmatpush.msra.mxu0 %v1758
    %v1760 = vand.u32 %v38, 4294901760
    %1761 = vmatpush.msra.mxu0 %v1760
    %v1762 = vand.u32 %v37, 4294901760
    %1763 = vmatpush.msra.mxu0 %v1762
    %v1764 = vand.u32 %v36, 4294901760
    %1765 = vmatpush.msra.mxu0 %v1764
    %v1766 = vand.u32 %v35, 4294901760
    %1767 = vmatpush.msra.mxu0 %v1766
    %v1768 = vand.u32 %v34, 4294901760
    %1769 = vmatpush.msra.mxu0 %v1768
    %v1770 = vand.u32 %v33, 4294901760
    %1771 = vmatpush.msra.mxu0 %v1770
    %v1772 = vand.u32 %v32, 4294901760
    %1773 = vmatpush.msra.mxu0 %v1772
    %v1774 = vand.u32 %v31, 4294901760
    %1775 = vmatpush.msra.mxu0 %v1774
    %v1776 = vand.u32 %v1439, 4294901760
    %1777 = vmatmul.f32.gmra.mxu0 %v1776
    %v1778 = vpop.f32.mrf.mxu0
    %v1779 = vadd.f32 %v1742, %v1778
    %1780 = vdwg.mxu0
    %v1781 = vperm.slane %v47, 4
    %v1782 = vadd.f32 %v1781, %v1779
    %v1783 = vperm.slane %v29, 2
    %v1784 = vsub.f32 %v26, %v1783
    %v1785 = vsub.f32 %v24, %v1783
    %v1786 = vmul.f32 %v1784, %v1784
    %v1787 = vperm.slane %v30, 0
    %v1788 = vmul.f32 %v1786, %v1787
    %v1789 = vand.u32 %v46, 4294901760
    %1790 = vmatpush.msra.mxu0 %v1789
    %v1791 = vand.u32 %v45, 4294901760
    %1792 = vmatpush.msra.mxu0 %v1791
    %v1793 = vand.u32 %v44, 4294901760
    %1794 = vmatpush.msra.mxu0 %v1793
    %v1795 = vand.u32 %v43, 4294901760
    %1796 = vmatpush.msra.mxu0 %v1795
    %v1797 = vand.u32 %v42, 4294901760
    %1798 = vmatpush.msra.mxu0 %v1797
    %v1799 = vand.u32 %v41, 4294901760
    %1800 = vmatpush.msra.mxu0 %v1799
    %v1801 = vand.u32 %v40, 4294901760
    %1802 = vmatpush.msra.mxu0 %v1801
    %v1803 = vand.u32 %v39, 4294901760
    %1804 = vmatpush.msra.mxu0 %v1803
    %v1805 = vand.u32 %v38, 4294901760
    %1806 = vmatpush.msra.mxu0 %v1805
    %v1807 = vand.u32 %v37, 4294901760
    %1808 = vmatpush.msra.mxu0 %v1807
    %v1809 = vand.u32 %v36, 4294901760
    %1810 = vmatpush.msra.mxu0 %v1809
    %v1811 = vand.u32 %v35, 4294901760
    %1812 = vmatpush.msra.mxu0 %v1811
    %v1813 = vand.u32 %v34, 4294901760
    %1814 = vmatpush.msra.mxu0 %v1813
    %v1815 = vand.u32 %v33, 4294901760
    %1816 = vmatpush.msra.mxu0 %v1815
    %v1817 = vand.u32 %v32, 4294901760
    %1818 = vmatpush.msra.mxu0 %v1817
    %v1819 = vand.u32 %v31, 4294901760
    %1820 = vmatpush.msra.mxu0 %v1819
    %v1821 = vand.u32 %v1788, 4294901760
    %v1822 = vsub.f32 %v1788, %v1821
    %v1823 = vand.u32 %v1822, 4294901760
    %v1824 = vsub.f32 %v1822, %v1823
    %v1825 = vand.u32 %v1824, 4294901760
    %1826 = vmatmul.f32.gmra.mxu0 %v1825
    %v1827 = vpop.f32.mrf.mxu0
    %v1828 = vadd.f32 0.0, %v1827
    %1829 = vdwg.mxu0
    %v1830 = vand.u32 %v46, 4294901760
    %v1831 = vsub.f32 %v46, %v1830
    %v1832 = vand.u32 %v1831, 4294901760
    %v1833 = vsub.f32 %v1831, %v1832
    %v1834 = vand.u32 %v1833, 4294901760
    %1835 = vmatpush.msra.mxu0 %v1834
    %v1836 = vand.u32 %v45, 4294901760
    %v1837 = vsub.f32 %v45, %v1836
    %v1838 = vand.u32 %v1837, 4294901760
    %v1839 = vsub.f32 %v1837, %v1838
    %v1840 = vand.u32 %v1839, 4294901760
    %1841 = vmatpush.msra.mxu0 %v1840
    %v1842 = vand.u32 %v44, 4294901760
    %v1843 = vsub.f32 %v44, %v1842
    %v1844 = vand.u32 %v1843, 4294901760
    %v1845 = vsub.f32 %v1843, %v1844
    %v1846 = vand.u32 %v1845, 4294901760
    %1847 = vmatpush.msra.mxu0 %v1846
    %v1848 = vand.u32 %v43, 4294901760
    %v1849 = vsub.f32 %v43, %v1848
    %v1850 = vand.u32 %v1849, 4294901760
    %v1851 = vsub.f32 %v1849, %v1850
    %v1852 = vand.u32 %v1851, 4294901760
    %1853 = vmatpush.msra.mxu0 %v1852
    %v1854 = vand.u32 %v42, 4294901760
    %v1855 = vsub.f32 %v42, %v1854
    %v1856 = vand.u32 %v1855, 4294901760
    %v1857 = vsub.f32 %v1855, %v1856
    %v1858 = vand.u32 %v1857, 4294901760
    %1859 = vmatpush.msra.mxu0 %v1858
    %v1860 = vand.u32 %v41, 4294901760
    %v1861 = vsub.f32 %v41, %v1860
    %v1862 = vand.u32 %v1861, 4294901760
    %v1863 = vsub.f32 %v1861, %v1862
    %v1864 = vand.u32 %v1863, 4294901760
    %1865 = vmatpush.msra.mxu0 %v1864
    %v1866 = vand.u32 %v40, 4294901760
    %v1867 = vsub.f32 %v40, %v1866
    %v1868 = vand.u32 %v1867, 4294901760
    %v1869 = vsub.f32 %v1867, %v1868
    %v1870 = vand.u32 %v1869, 4294901760
    %1871 = vmatpush.msra.mxu0 %v1870
    %v1872 = vand.u32 %v39, 4294901760
    %v1873 = vsub.f32 %v39, %v1872
    %v1874 = vand.u32 %v1873, 4294901760
    %v1875 = vsub.f32 %v1873, %v1874
    %v1876 = vand.u32 %v1875, 4294901760
    %1877 = vmatpush.msra.mxu0 %v1876
    %v1878 = vand.u32 %v38, 4294901760
    %v1879 = vsub.f32 %v38, %v1878
    %v1880 = vand.u32 %v1879, 4294901760
    %v1881 = vsub.f32 %v1879, %v1880
    %v1882 = vand.u32 %v1881, 4294901760
    %1883 = vmatpush.msra.mxu0 %v1882
    %v1884 = vand.u32 %v37, 4294901760
    %v1885 = vsub.f32 %v37, %v1884
    %v1886 = vand.u32 %v1885, 4294901760
    %v1887 = vsub.f32 %v1885, %v1886
    %v1888 = vand.u32 %v1887, 4294901760
    %1889 = vmatpush.msra.mxu0 %v1888
    %v1890 = vand.u32 %v36, 4294901760
    %v1891 = vsub.f32 %v36, %v1890
    %v1892 = vand.u32 %v1891, 4294901760
    %v1893 = vsub.f32 %v1891, %v1892
    %v1894 = vand.u32 %v1893, 4294901760
    %1895 = vmatpush.msra.mxu0 %v1894
    %v1896 = vand.u32 %v35, 4294901760
    %v1897 = vsub.f32 %v35, %v1896
    %v1898 = vand.u32 %v1897, 4294901760
    %v1899 = vsub.f32 %v1897, %v1898
    %v1900 = vand.u32 %v1899, 4294901760
    %1901 = vmatpush.msra.mxu0 %v1900
    %v1902 = vand.u32 %v34, 4294901760
    %v1903 = vsub.f32 %v34, %v1902
    %v1904 = vand.u32 %v1903, 4294901760
    %v1905 = vsub.f32 %v1903, %v1904
    %v1906 = vand.u32 %v1905, 4294901760
    %1907 = vmatpush.msra.mxu0 %v1906
    %v1908 = vand.u32 %v33, 4294901760
    %v1909 = vsub.f32 %v33, %v1908
    %v1910 = vand.u32 %v1909, 4294901760
    %v1911 = vsub.f32 %v1909, %v1910
    %v1912 = vand.u32 %v1911, 4294901760
    %1913 = vmatpush.msra.mxu0 %v1912
    %v1914 = vand.u32 %v32, 4294901760
    %v1915 = vsub.f32 %v32, %v1914
    %v1916 = vand.u32 %v1915, 4294901760
    %v1917 = vsub.f32 %v1915, %v1916
    %v1918 = vand.u32 %v1917, 4294901760
    %1919 = vmatpush.msra.mxu0 %v1918
    %v1920 = vand.u32 %v31, 4294901760
    %v1921 = vsub.f32 %v31, %v1920
    %v1922 = vand.u32 %v1921, 4294901760
    %v1923 = vsub.f32 %v1921, %v1922
    %v1924 = vand.u32 %v1923, 4294901760
    %1925 = vmatpush.msra.mxu0 %v1924
    %v1926 = vand.u32 %v1788, 4294901760
    %1927 = vmatmul.f32.gmra.mxu0 %v1926
    %v1928 = vpop.f32.mrf.mxu0
    %v1929 = vadd.f32 %v1828, %v1928
    %1930 = vdwg.mxu0
    %v1931 = vand.u32 %v46, 4294901760
    %v1932 = vsub.f32 %v46, %v1931
    %1933 = vmatpush.msra.mxu0 %v1932
    %v1934 = vand.u32 %v45, 4294901760
    %v1935 = vsub.f32 %v45, %v1934
    %1936 = vmatpush.msra.mxu0 %v1935
    %v1937 = vand.u32 %v44, 4294901760
    %v1938 = vsub.f32 %v44, %v1937
    %1939 = vmatpush.msra.mxu0 %v1938
    %v1940 = vand.u32 %v43, 4294901760
    %v1941 = vsub.f32 %v43, %v1940
    %1942 = vmatpush.msra.mxu0 %v1941
    %v1943 = vand.u32 %v42, 4294901760
    %v1944 = vsub.f32 %v42, %v1943
    %1945 = vmatpush.msra.mxu0 %v1944
    %v1946 = vand.u32 %v41, 4294901760
    %v1947 = vsub.f32 %v41, %v1946
    %1948 = vmatpush.msra.mxu0 %v1947
    %v1949 = vand.u32 %v40, 4294901760
    %v1950 = vsub.f32 %v40, %v1949
    %1951 = vmatpush.msra.mxu0 %v1950
    %v1952 = vand.u32 %v39, 4294901760
    %v1953 = vsub.f32 %v39, %v1952
    %1954 = vmatpush.msra.mxu0 %v1953
    %v1955 = vand.u32 %v38, 4294901760
    %v1956 = vsub.f32 %v38, %v1955
    %1957 = vmatpush.msra.mxu0 %v1956
    %v1958 = vand.u32 %v37, 4294901760
    %v1959 = vsub.f32 %v37, %v1958
    %1960 = vmatpush.msra.mxu0 %v1959
    %v1961 = vand.u32 %v36, 4294901760
    %v1962 = vsub.f32 %v36, %v1961
    %1963 = vmatpush.msra.mxu0 %v1962
    %v1964 = vand.u32 %v35, 4294901760
    %v1965 = vsub.f32 %v35, %v1964
    %1966 = vmatpush.msra.mxu0 %v1965
    %v1967 = vand.u32 %v34, 4294901760
    %v1968 = vsub.f32 %v34, %v1967
    %1969 = vmatpush.msra.mxu0 %v1968
    %v1970 = vand.u32 %v33, 4294901760
    %v1971 = vsub.f32 %v33, %v1970
    %1972 = vmatpush.msra.mxu0 %v1971
    %v1973 = vand.u32 %v32, 4294901760
    %v1974 = vsub.f32 %v32, %v1973
    %1975 = vmatpush.msra.mxu0 %v1974
    %v1976 = vand.u32 %v31, 4294901760
    %v1977 = vsub.f32 %v31, %v1976
    %1978 = vmatpush.msra.mxu0 %v1977
    %v1979 = vand.u32 %v1788, 4294901760
    %v1980 = vsub.f32 %v1788, %v1979
    %1981 = vmatmul.f32.gmra.mxu0 %v1980
    %v1982 = vpop.f32.mrf.mxu0
    %v1983 = vadd.f32 %v1929, %v1982
    %1984 = vdwg.mxu0
    %v1985 = vand.u32 %v46, 4294901760
    %1986 = vmatpush.msra.mxu0 %v1985
    %v1987 = vand.u32 %v45, 4294901760
    %1988 = vmatpush.msra.mxu0 %v1987
    %v1989 = vand.u32 %v44, 4294901760
    %1990 = vmatpush.msra.mxu0 %v1989
    %v1991 = vand.u32 %v43, 4294901760
    %1992 = vmatpush.msra.mxu0 %v1991
    %v1993 = vand.u32 %v42, 4294901760
    %1994 = vmatpush.msra.mxu0 %v1993
    %v1995 = vand.u32 %v41, 4294901760
    %1996 = vmatpush.msra.mxu0 %v1995
    %v1997 = vand.u32 %v40, 4294901760
    %1998 = vmatpush.msra.mxu0 %v1997
    %v1999 = vand.u32 %v39, 4294901760
    %2000 = vmatpush.msra.mxu0 %v1999
    %v2001 = vand.u32 %v38, 4294901760
    %2002 = vmatpush.msra.mxu0 %v2001
    %v2003 = vand.u32 %v37, 4294901760
    %2004 = vmatpush.msra.mxu0 %v2003
    %v2005 = vand.u32 %v36, 4294901760
    %2006 = vmatpush.msra.mxu0 %v2005
    %v2007 = vand.u32 %v35, 4294901760
    %2008 = vmatpush.msra.mxu0 %v2007
    %v2009 = vand.u32 %v34, 4294901760
    %2010 = vmatpush.msra.mxu0 %v2009
    %v2011 = vand.u32 %v33, 4294901760
    %2012 = vmatpush.msra.mxu0 %v2011
    %v2013 = vand.u32 %v32, 4294901760
    %2014 = vmatpush.msra.mxu0 %v2013
    %v2015 = vand.u32 %v31, 4294901760
    %2016 = vmatpush.msra.mxu0 %v2015
    %v2017 = vand.u32 %v1788, 4294901760
    %v2018 = vsub.f32 %v1788, %v2017
    %v2019 = vand.u32 %v2018, 4294901760
    %2020 = vmatmul.f32.gmra.mxu0 %v2019
    %v2021 = vpop.f32.mrf.mxu0
    %v2022 = vadd.f32 %v1983, %v2021
    %2023 = vdwg.mxu0
    %v2024 = vand.u32 %v46, 4294901760
    %v2025 = vsub.f32 %v46, %v2024
    %v2026 = vand.u32 %v2025, 4294901760
    %2027 = vmatpush.msra.mxu0 %v2026
    %v2028 = vand.u32 %v45, 4294901760
    %v2029 = vsub.f32 %v45, %v2028
    %v2030 = vand.u32 %v2029, 4294901760
    %2031 = vmatpush.msra.mxu0 %v2030
    %v2032 = vand.u32 %v44, 4294901760
    %v2033 = vsub.f32 %v44, %v2032
    %v2034 = vand.u32 %v2033, 4294901760
    %2035 = vmatpush.msra.mxu0 %v2034
    %v2036 = vand.u32 %v43, 4294901760
    %v2037 = vsub.f32 %v43, %v2036
    %v2038 = vand.u32 %v2037, 4294901760
    %2039 = vmatpush.msra.mxu0 %v2038
    %v2040 = vand.u32 %v42, 4294901760
    %v2041 = vsub.f32 %v42, %v2040
    %v2042 = vand.u32 %v2041, 4294901760
    %2043 = vmatpush.msra.mxu0 %v2042
    %v2044 = vand.u32 %v41, 4294901760
    %v2045 = vsub.f32 %v41, %v2044
    %v2046 = vand.u32 %v2045, 4294901760
    %2047 = vmatpush.msra.mxu0 %v2046
    %v2048 = vand.u32 %v40, 4294901760
    %v2049 = vsub.f32 %v40, %v2048
    %v2050 = vand.u32 %v2049, 4294901760
    %2051 = vmatpush.msra.mxu0 %v2050
    %v2052 = vand.u32 %v39, 4294901760
    %v2053 = vsub.f32 %v39, %v2052
    %v2054 = vand.u32 %v2053, 4294901760
    %2055 = vmatpush.msra.mxu0 %v2054
    %v2056 = vand.u32 %v38, 4294901760
    %v2057 = vsub.f32 %v38, %v2056
    %v2058 = vand.u32 %v2057, 4294901760
    %2059 = vmatpush.msra.mxu0 %v2058
    %v2060 = vand.u32 %v37, 4294901760
    %v2061 = vsub.f32 %v37, %v2060
    %v2062 = vand.u32 %v2061, 4294901760
    %2063 = vmatpush.msra.mxu0 %v2062
    %v2064 = vand.u32 %v36, 4294901760
    %v2065 = vsub.f32 %v36, %v2064
    %v2066 = vand.u32 %v2065, 4294901760
    %2067 = vmatpush.msra.mxu0 %v2066
    %v2068 = vand.u32 %v35, 4294901760
    %v2069 = vsub.f32 %v35, %v2068
    %v2070 = vand.u32 %v2069, 4294901760
    %2071 = vmatpush.msra.mxu0 %v2070
    %v2072 = vand.u32 %v34, 4294901760
    %v2073 = vsub.f32 %v34, %v2072
    %v2074 = vand.u32 %v2073, 4294901760
    %2075 = vmatpush.msra.mxu0 %v2074
    %v2076 = vand.u32 %v33, 4294901760
    %v2077 = vsub.f32 %v33, %v2076
    %v2078 = vand.u32 %v2077, 4294901760
    %2079 = vmatpush.msra.mxu0 %v2078
    %v2080 = vand.u32 %v32, 4294901760
    %v2081 = vsub.f32 %v32, %v2080
    %v2082 = vand.u32 %v2081, 4294901760
    %2083 = vmatpush.msra.mxu0 %v2082
    %v2084 = vand.u32 %v31, 4294901760
    %v2085 = vsub.f32 %v31, %v2084
    %v2086 = vand.u32 %v2085, 4294901760
    %2087 = vmatpush.msra.mxu0 %v2086
    %v2088 = vand.u32 %v1788, 4294901760
    %2089 = vmatmul.f32.gmra.mxu0 %v2088
    %v2090 = vpop.f32.mrf.mxu0
    %v2091 = vadd.f32 %v2022, %v2090
    %2092 = vdwg.mxu0
    %v2093 = vand.u32 %v46, 4294901760
    %2094 = vmatpush.msra.mxu0 %v2093
    %v2095 = vand.u32 %v45, 4294901760
    %2096 = vmatpush.msra.mxu0 %v2095
    %v2097 = vand.u32 %v44, 4294901760
    %2098 = vmatpush.msra.mxu0 %v2097
    %v2099 = vand.u32 %v43, 4294901760
    %2100 = vmatpush.msra.mxu0 %v2099
    %v2101 = vand.u32 %v42, 4294901760
    %2102 = vmatpush.msra.mxu0 %v2101
    %v2103 = vand.u32 %v41, 4294901760
    %2104 = vmatpush.msra.mxu0 %v2103
    %v2105 = vand.u32 %v40, 4294901760
    %2106 = vmatpush.msra.mxu0 %v2105
    %v2107 = vand.u32 %v39, 4294901760
    %2108 = vmatpush.msra.mxu0 %v2107
    %v2109 = vand.u32 %v38, 4294901760
    %2110 = vmatpush.msra.mxu0 %v2109
    %v2111 = vand.u32 %v37, 4294901760
    %2112 = vmatpush.msra.mxu0 %v2111
    %v2113 = vand.u32 %v36, 4294901760
    %2114 = vmatpush.msra.mxu0 %v2113
    %v2115 = vand.u32 %v35, 4294901760
    %2116 = vmatpush.msra.mxu0 %v2115
    %v2117 = vand.u32 %v34, 4294901760
    %2118 = vmatpush.msra.mxu0 %v2117
    %v2119 = vand.u32 %v33, 4294901760
    %2120 = vmatpush.msra.mxu0 %v2119
    %v2121 = vand.u32 %v32, 4294901760
    %2122 = vmatpush.msra.mxu0 %v2121
    %v2123 = vand.u32 %v31, 4294901760
    %2124 = vmatpush.msra.mxu0 %v2123
    %v2125 = vand.u32 %v1788, 4294901760
    %2126 = vmatmul.f32.gmra.mxu0 %v2125
    %v2127 = vpop.f32.mrf.mxu0
    %v2128 = vadd.f32 %v2091, %v2127
    %2129 = vdwg.mxu0
    %v2130 = vperm.slane %v47, 2
    %v2131 = vsub.f32 %v2130, %v2128
    %v2132 = vmul.f32 %v1785, %v1785
    %v2133 = vadd.f32 %v28, %v2132
    %v2134 = vperm.slane %v29, 5
    %v2135 = vmul.f32 %v2133, %v2134
    %v2136 = vand.u32 %v46, 4294901760
    %2137 = vmatpush.msra.mxu0 %v2136
    %v2138 = vand.u32 %v45, 4294901760
    %2139 = vmatpush.msra.mxu0 %v2138
    %v2140 = vand.u32 %v44, 4294901760
    %2141 = vmatpush.msra.mxu0 %v2140
    %v2142 = vand.u32 %v43, 4294901760
    %2143 = vmatpush.msra.mxu0 %v2142
    %v2144 = vand.u32 %v42, 4294901760
    %2145 = vmatpush.msra.mxu0 %v2144
    %v2146 = vand.u32 %v41, 4294901760
    %2147 = vmatpush.msra.mxu0 %v2146
    %v2148 = vand.u32 %v40, 4294901760
    %2149 = vmatpush.msra.mxu0 %v2148
    %v2150 = vand.u32 %v39, 4294901760
    %2151 = vmatpush.msra.mxu0 %v2150
    %v2152 = vand.u32 %v38, 4294901760
    %2153 = vmatpush.msra.mxu0 %v2152
    %v2154 = vand.u32 %v37, 4294901760
    %2155 = vmatpush.msra.mxu0 %v2154
    %v2156 = vand.u32 %v36, 4294901760
    %2157 = vmatpush.msra.mxu0 %v2156
    %v2158 = vand.u32 %v35, 4294901760
    %2159 = vmatpush.msra.mxu0 %v2158
    %v2160 = vand.u32 %v34, 4294901760
    %2161 = vmatpush.msra.mxu0 %v2160
    %v2162 = vand.u32 %v33, 4294901760
    %2163 = vmatpush.msra.mxu0 %v2162
    %v2164 = vand.u32 %v32, 4294901760
    %2165 = vmatpush.msra.mxu0 %v2164
    %v2166 = vand.u32 %v31, 4294901760
    %2167 = vmatpush.msra.mxu0 %v2166
    %v2168 = vand.u32 %v2135, 4294901760
    %v2169 = vsub.f32 %v2135, %v2168
    %v2170 = vand.u32 %v2169, 4294901760
    %v2171 = vsub.f32 %v2169, %v2170
    %v2172 = vand.u32 %v2171, 4294901760
    %2173 = vmatmul.f32.gmra.mxu0 %v2172
    %v2174 = vpop.f32.mrf.mxu0
    %v2175 = vadd.f32 0.0, %v2174
    %2176 = vdwg.mxu0
    %v2177 = vand.u32 %v46, 4294901760
    %v2178 = vsub.f32 %v46, %v2177
    %v2179 = vand.u32 %v2178, 4294901760
    %v2180 = vsub.f32 %v2178, %v2179
    %v2181 = vand.u32 %v2180, 4294901760
    %2182 = vmatpush.msra.mxu0 %v2181
    %v2183 = vand.u32 %v45, 4294901760
    %v2184 = vsub.f32 %v45, %v2183
    %v2185 = vand.u32 %v2184, 4294901760
    %v2186 = vsub.f32 %v2184, %v2185
    %v2187 = vand.u32 %v2186, 4294901760
    %2188 = vmatpush.msra.mxu0 %v2187
    %v2189 = vand.u32 %v44, 4294901760
    %v2190 = vsub.f32 %v44, %v2189
    %v2191 = vand.u32 %v2190, 4294901760
    %v2192 = vsub.f32 %v2190, %v2191
    %v2193 = vand.u32 %v2192, 4294901760
    %2194 = vmatpush.msra.mxu0 %v2193
    %v2195 = vand.u32 %v43, 4294901760
    %v2196 = vsub.f32 %v43, %v2195
    %v2197 = vand.u32 %v2196, 4294901760
    %v2198 = vsub.f32 %v2196, %v2197
    %v2199 = vand.u32 %v2198, 4294901760
    %2200 = vmatpush.msra.mxu0 %v2199
    %v2201 = vand.u32 %v42, 4294901760
    %v2202 = vsub.f32 %v42, %v2201
    %v2203 = vand.u32 %v2202, 4294901760
    %v2204 = vsub.f32 %v2202, %v2203
    %v2205 = vand.u32 %v2204, 4294901760
    %2206 = vmatpush.msra.mxu0 %v2205
    %v2207 = vand.u32 %v41, 4294901760
    %v2208 = vsub.f32 %v41, %v2207
    %v2209 = vand.u32 %v2208, 4294901760
    %v2210 = vsub.f32 %v2208, %v2209
    %v2211 = vand.u32 %v2210, 4294901760
    %2212 = vmatpush.msra.mxu0 %v2211
    %v2213 = vand.u32 %v40, 4294901760
    %v2214 = vsub.f32 %v40, %v2213
    %v2215 = vand.u32 %v2214, 4294901760
    %v2216 = vsub.f32 %v2214, %v2215
    %v2217 = vand.u32 %v2216, 4294901760
    %2218 = vmatpush.msra.mxu0 %v2217
    %v2219 = vand.u32 %v39, 4294901760
    %v2220 = vsub.f32 %v39, %v2219
    %v2221 = vand.u32 %v2220, 4294901760
    %v2222 = vsub.f32 %v2220, %v2221
    %v2223 = vand.u32 %v2222, 4294901760
    %2224 = vmatpush.msra.mxu0 %v2223
    %v2225 = vand.u32 %v38, 4294901760
    %v2226 = vsub.f32 %v38, %v2225
    %v2227 = vand.u32 %v2226, 4294901760
    %v2228 = vsub.f32 %v2226, %v2227
    %v2229 = vand.u32 %v2228, 4294901760
    %2230 = vmatpush.msra.mxu0 %v2229
    %v2231 = vand.u32 %v37, 4294901760
    %v2232 = vsub.f32 %v37, %v2231
    %v2233 = vand.u32 %v2232, 4294901760
    %v2234 = vsub.f32 %v2232, %v2233
    %v2235 = vand.u32 %v2234, 4294901760
    %2236 = vmatpush.msra.mxu0 %v2235
    %v2237 = vand.u32 %v36, 4294901760
    %v2238 = vsub.f32 %v36, %v2237
    %v2239 = vand.u32 %v2238, 4294901760
    %v2240 = vsub.f32 %v2238, %v2239
    %v2241 = vand.u32 %v2240, 4294901760
    %2242 = vmatpush.msra.mxu0 %v2241
    %v2243 = vand.u32 %v35, 4294901760
    %v2244 = vsub.f32 %v35, %v2243
    %v2245 = vand.u32 %v2244, 4294901760
    %v2246 = vsub.f32 %v2244, %v2245
    %v2247 = vand.u32 %v2246, 4294901760
    %2248 = vmatpush.msra.mxu0 %v2247
    %v2249 = vand.u32 %v34, 4294901760
    %v2250 = vsub.f32 %v34, %v2249
    %v2251 = vand.u32 %v2250, 4294901760
    %v2252 = vsub.f32 %v2250, %v2251
    %v2253 = vand.u32 %v2252, 4294901760
    %2254 = vmatpush.msra.mxu0 %v2253
    %v2255 = vand.u32 %v33, 4294901760
    %v2256 = vsub.f32 %v33, %v2255
    %v2257 = vand.u32 %v2256, 4294901760
    %v2258 = vsub.f32 %v2256, %v2257
    %v2259 = vand.u32 %v2258, 4294901760
    %2260 = vmatpush.msra.mxu0 %v2259
    %v2261 = vand.u32 %v32, 4294901760
    %v2262 = vsub.f32 %v32, %v2261
    %v2263 = vand.u32 %v2262, 4294901760
    %v2264 = vsub.f32 %v2262, %v2263
    %v2265 = vand.u32 %v2264, 4294901760
    %2266 = vmatpush.msra.mxu0 %v2265
    %v2267 = vand.u32 %v31, 4294901760
    %v2268 = vsub.f32 %v31, %v2267
    %v2269 = vand.u32 %v2268, 4294901760
    %v2270 = vsub.f32 %v2268, %v2269
    %v2271 = vand.u32 %v2270, 4294901760
    %2272 = vmatpush.msra.mxu0 %v2271
    %v2273 = vand.u32 %v2135, 4294901760
    %2274 = vmatmul.f32.gmra.mxu0 %v2273
    %v2275 = vpop.f32.mrf.mxu0
    %v2276 = vadd.f32 %v2175, %v2275
    %2277 = vdwg.mxu0
    %v2278 = vand.u32 %v46, 4294901760
    %v2279 = vsub.f32 %v46, %v2278
    %2280 = vmatpush.msra.mxu0 %v2279
    %v2281 = vand.u32 %v45, 4294901760
    %v2282 = vsub.f32 %v45, %v2281
    %2283 = vmatpush.msra.mxu0 %v2282
    %v2284 = vand.u32 %v44, 4294901760
    %v2285 = vsub.f32 %v44, %v2284
    %2286 = vmatpush.msra.mxu0 %v2285
    %v2287 = vand.u32 %v43, 4294901760
    %v2288 = vsub.f32 %v43, %v2287
    %2289 = vmatpush.msra.mxu0 %v2288
    %v2290 = vand.u32 %v42, 4294901760
    %v2291 = vsub.f32 %v42, %v2290
    %2292 = vmatpush.msra.mxu0 %v2291
    %v2293 = vand.u32 %v41, 4294901760
    %v2294 = vsub.f32 %v41, %v2293
    %2295 = vmatpush.msra.mxu0 %v2294
    %v2296 = vand.u32 %v40, 4294901760
    %v2297 = vsub.f32 %v40, %v2296
    %2298 = vmatpush.msra.mxu0 %v2297
    %v2299 = vand.u32 %v39, 4294901760
    %v2300 = vsub.f32 %v39, %v2299
    %2301 = vmatpush.msra.mxu0 %v2300
    %v2302 = vand.u32 %v38, 4294901760
    %v2303 = vsub.f32 %v38, %v2302
    %2304 = vmatpush.msra.mxu0 %v2303
    %v2305 = vand.u32 %v37, 4294901760
    %v2306 = vsub.f32 %v37, %v2305
    %2307 = vmatpush.msra.mxu0 %v2306
    %v2308 = vand.u32 %v36, 4294901760
    %v2309 = vsub.f32 %v36, %v2308
    %2310 = vmatpush.msra.mxu0 %v2309
    %v2311 = vand.u32 %v35, 4294901760
    %v2312 = vsub.f32 %v35, %v2311
    %2313 = vmatpush.msra.mxu0 %v2312
    %v2314 = vand.u32 %v34, 4294901760
    %v2315 = vsub.f32 %v34, %v2314
    %2316 = vmatpush.msra.mxu0 %v2315
    %v2317 = vand.u32 %v33, 4294901760
    %v2318 = vsub.f32 %v33, %v2317
    %2319 = vmatpush.msra.mxu0 %v2318
    %v2320 = vand.u32 %v32, 4294901760
    %v2321 = vsub.f32 %v32, %v2320
    %2322 = vmatpush.msra.mxu0 %v2321
    %v2323 = vand.u32 %v31, 4294901760
    %v2324 = vsub.f32 %v31, %v2323
    %2325 = vmatpush.msra.mxu0 %v2324
    %v2326 = vand.u32 %v2135, 4294901760
    %v2327 = vsub.f32 %v2135, %v2326
    %2328 = vmatmul.f32.gmra.mxu0 %v2327
    %v2329 = vpop.f32.mrf.mxu0
    %v2330 = vadd.f32 %v2276, %v2329
    %2331 = vdwg.mxu0
    %v2332 = vand.u32 %v46, 4294901760
    %2333 = vmatpush.msra.mxu0 %v2332
    %v2334 = vand.u32 %v45, 4294901760
    %2335 = vmatpush.msra.mxu0 %v2334
    %v2336 = vand.u32 %v44, 4294901760
    %2337 = vmatpush.msra.mxu0 %v2336
    %v2338 = vand.u32 %v43, 4294901760
    %2339 = vmatpush.msra.mxu0 %v2338
    %v2340 = vand.u32 %v42, 4294901760
    %2341 = vmatpush.msra.mxu0 %v2340
    %v2342 = vand.u32 %v41, 4294901760
    %2343 = vmatpush.msra.mxu0 %v2342
    %v2344 = vand.u32 %v40, 4294901760
    %2345 = vmatpush.msra.mxu0 %v2344
    %v2346 = vand.u32 %v39, 4294901760
    %2347 = vmatpush.msra.mxu0 %v2346
    %v2348 = vand.u32 %v38, 4294901760
    %2349 = vmatpush.msra.mxu0 %v2348
    %v2350 = vand.u32 %v37, 4294901760
    %2351 = vmatpush.msra.mxu0 %v2350
    %v2352 = vand.u32 %v36, 4294901760
    %2353 = vmatpush.msra.mxu0 %v2352
    %v2354 = vand.u32 %v35, 4294901760
    %2355 = vmatpush.msra.mxu0 %v2354
    %v2356 = vand.u32 %v34, 4294901760
    %2357 = vmatpush.msra.mxu0 %v2356
    %v2358 = vand.u32 %v33, 4294901760
    %2359 = vmatpush.msra.mxu0 %v2358
    %v2360 = vand.u32 %v32, 4294901760
    %2361 = vmatpush.msra.mxu0 %v2360
    %v2362 = vand.u32 %v31, 4294901760
    %2363 = vmatpush.msra.mxu0 %v2362
    %v2364 = vand.u32 %v2135, 4294901760
    %v2365 = vsub.f32 %v2135, %v2364
    %v2366 = vand.u32 %v2365, 4294901760
    %2367 = vmatmul.f32.gmra.mxu0 %v2366
    %v2368 = vpop.f32.mrf.mxu0
    %v2369 = vadd.f32 %v2330, %v2368
    %2370 = vdwg.mxu0
    %v2371 = vand.u32 %v46, 4294901760
    %v2372 = vsub.f32 %v46, %v2371
    %v2373 = vand.u32 %v2372, 4294901760
    %2374 = vmatpush.msra.mxu0 %v2373
    %v2375 = vand.u32 %v45, 4294901760
    %v2376 = vsub.f32 %v45, %v2375
    %v2377 = vand.u32 %v2376, 4294901760
    %2378 = vmatpush.msra.mxu0 %v2377
    %v2379 = vand.u32 %v44, 4294901760
    %v2380 = vsub.f32 %v44, %v2379
    %v2381 = vand.u32 %v2380, 4294901760
    %2382 = vmatpush.msra.mxu0 %v2381
    %v2383 = vand.u32 %v43, 4294901760
    %v2384 = vsub.f32 %v43, %v2383
    %v2385 = vand.u32 %v2384, 4294901760
    %2386 = vmatpush.msra.mxu0 %v2385
    %v2387 = vand.u32 %v42, 4294901760
    %v2388 = vsub.f32 %v42, %v2387
    %v2389 = vand.u32 %v2388, 4294901760
    %2390 = vmatpush.msra.mxu0 %v2389
    %v2391 = vand.u32 %v41, 4294901760
    %v2392 = vsub.f32 %v41, %v2391
    %v2393 = vand.u32 %v2392, 4294901760
    %2394 = vmatpush.msra.mxu0 %v2393
    %v2395 = vand.u32 %v40, 4294901760
    %v2396 = vsub.f32 %v40, %v2395
    %v2397 = vand.u32 %v2396, 4294901760
    %2398 = vmatpush.msra.mxu0 %v2397
    %v2399 = vand.u32 %v39, 4294901760
    %v2400 = vsub.f32 %v39, %v2399
    %v2401 = vand.u32 %v2400, 4294901760
    %2402 = vmatpush.msra.mxu0 %v2401
    %v2403 = vand.u32 %v38, 4294901760
    %v2404 = vsub.f32 %v38, %v2403
    %v2405 = vand.u32 %v2404, 4294901760
    %2406 = vmatpush.msra.mxu0 %v2405
    %v2407 = vand.u32 %v37, 4294901760
    %v2408 = vsub.f32 %v37, %v2407
    %v2409 = vand.u32 %v2408, 4294901760
    %2410 = vmatpush.msra.mxu0 %v2409
    %v2411 = vand.u32 %v36, 4294901760
    %v2412 = vsub.f32 %v36, %v2411
    %v2413 = vand.u32 %v2412, 4294901760
    %2414 = vmatpush.msra.mxu0 %v2413
    %v2415 = vand.u32 %v35, 4294901760
    %v2416 = vsub.f32 %v35, %v2415
    %v2417 = vand.u32 %v2416, 4294901760
    %2418 = vmatpush.msra.mxu0 %v2417
    %v2419 = vand.u32 %v34, 4294901760
    %v2420 = vsub.f32 %v34, %v2419
    %v2421 = vand.u32 %v2420, 4294901760
    %2422 = vmatpush.msra.mxu0 %v2421
    %v2423 = vand.u32 %v33, 4294901760
    %v2424 = vsub.f32 %v33, %v2423
    %v2425 = vand.u32 %v2424, 4294901760
    %2426 = vmatpush.msra.mxu0 %v2425
    %v2427 = vand.u32 %v32, 4294901760
    %v2428 = vsub.f32 %v32, %v2427
    %v2429 = vand.u32 %v2428, 4294901760
    %2430 = vmatpush.msra.mxu0 %v2429
    %v2431 = vand.u32 %v31, 4294901760
    %v2432 = vsub.f32 %v31, %v2431
    %v2433 = vand.u32 %v2432, 4294901760
    %2434 = vmatpush.msra.mxu0 %v2433
    %v2435 = vand.u32 %v2135, 4294901760
    %2436 = vmatmul.f32.gmra.mxu0 %v2435
    %v2437 = vpop.f32.mrf.mxu0
    %v2438 = vadd.f32 %v2369, %v2437
    %2439 = vdwg.mxu0
    %v2440 = vand.u32 %v46, 4294901760
    %2441 = vmatpush.msra.mxu0 %v2440
    %v2442 = vand.u32 %v45, 4294901760
    %2443 = vmatpush.msra.mxu0 %v2442
    %v2444 = vand.u32 %v44, 4294901760
    %2445 = vmatpush.msra.mxu0 %v2444
    %v2446 = vand.u32 %v43, 4294901760
    %2447 = vmatpush.msra.mxu0 %v2446
    %v2448 = vand.u32 %v42, 4294901760
    %2449 = vmatpush.msra.mxu0 %v2448
    %v2450 = vand.u32 %v41, 4294901760
    %2451 = vmatpush.msra.mxu0 %v2450
    %v2452 = vand.u32 %v40, 4294901760
    %2453 = vmatpush.msra.mxu0 %v2452
    %v2454 = vand.u32 %v39, 4294901760
    %2455 = vmatpush.msra.mxu0 %v2454
    %v2456 = vand.u32 %v38, 4294901760
    %2457 = vmatpush.msra.mxu0 %v2456
    %v2458 = vand.u32 %v37, 4294901760
    %2459 = vmatpush.msra.mxu0 %v2458
    %v2460 = vand.u32 %v36, 4294901760
    %2461 = vmatpush.msra.mxu0 %v2460
    %v2462 = vand.u32 %v35, 4294901760
    %2463 = vmatpush.msra.mxu0 %v2462
    %v2464 = vand.u32 %v34, 4294901760
    %2465 = vmatpush.msra.mxu0 %v2464
    %v2466 = vand.u32 %v33, 4294901760
    %2467 = vmatpush.msra.mxu0 %v2466
    %v2468 = vand.u32 %v32, 4294901760
    %2469 = vmatpush.msra.mxu0 %v2468
    %v2470 = vand.u32 %v31, 4294901760
    %2471 = vmatpush.msra.mxu0 %v2470
    %v2472 = vand.u32 %v2135, 4294901760
    %2473 = vmatmul.f32.gmra.mxu0 %v2472
    %v2474 = vpop.f32.mrf.mxu0
    %v2475 = vadd.f32 %v2438, %v2474
    %2476 = vdwg.mxu0
    %v2477 = vperm.slane %v47, 5
    %v2478 = vadd.f32 %v2477, %v2475
    %v2479 = vmax.f32 %v739, %v1435
    %v2480 = vmax.f32 %v2479, %v2131
    %v2481 = vsub.f32 %v739, %v2480
    %v2482 = vmul.f32 %v2481, 1.442695
    %v2483 = vpow.pop %v2482
    %v2484 = vsub.f32 %v1435, %v2480
    %v2485 = vmul.f32 %v2484, 1.442695
    %v2486 = vpow.pop %v2485
    %v2487 = vsub.f32 %v2131, %v2480
    %v2488 = vmul.f32 %v2487, 1.442695
    %v2489 = vpow.pop %v2488
    %v2490 = vadd.f32 %v2483, %v2486
    %v2491 = vadd.f32 %v2490, %v2489
    %v2492 = vlog2.pop %v2491
    %v2493 = vmul.f32 %v2492, 0.6931472
    %v2494 = vrcp.pop %v2491
    %v2495 = vmul.f32 %v2491, %v2494
    %v2496 = vsub.f32 1.0, %v2495
    %v2497 = vmul.f32 %v2494, %v2496
    %v2498 = vadd.f32 %v2494, %v2497
    %vm2499 = vweird.f32 %v2491
    %vm2500 = vweird.f32 %v2494
    %vm2501 = vmor %vm2499, %vm2500
    %v2502 = vsel %vm2501, %v2494, %v2498
    %v2503 = vand.u32 2147483647, %v2491
    %vm2504 = vcmp.eq.f32.partialorder %v2503, 8.507059e+37
    %v2505 = vand.u32 %v2491, 2147483648
    %v2506 = vor.u32 1.1754944e-38, %v2505
    %v2507 = vsel %vm2504, %v2506, %v2502
    %v2508 = vmul.f32 1.0, %v2507
    %v2509 = vmul.f32 %v2483, %v2508
    %v2510 = vsub.f32 %v2481, %v2493
    %v2511 = vmul.f32 %v1086, 0.5
    %v2512 = vperm.slane %v47, 6
    %v2513 = vsub.f32 %v2511, %v2512
    %v2514 = vadd.f32 %v2513, %v2510
    %v2515 = vmul.f32 %v2509, %v2514
    %v2516 = vadd.f32 %v390, %v2515
    %v2517 = vmul.f32 %v2486, %v2508
    %v2518 = vsub.f32 %v2484, %v2493
    %v2519 = vmul.f32 %v1782, 0.5
    %v2520 = vperm.slane %v47, 7
    %v2521 = vsub.f32 %v2519, %v2520
    %v2522 = vadd.f32 %v2521, %v2518
    %v2523 = vmul.f32 %v2517, %v2522
    %v2524 = vadd.f32 %v2516, %v2523
    %v2525 = vmul.f32 %v2489, %v2508
    %v2526 = vsub.f32 %v2487, %v2493
    %v2527 = vmul.f32 %v2478, 0.5
    %v2528 = vperm.slane %v48, 0
    %v2529 = vsub.f32 %v2527, %v2528
    %v2530 = vadd.f32 %v2529, %v2526
    %v2531 = vmul.f32 %v2525, %v2530
    %v2532 = vadd.f32 %v2524, %v2531
    %v2533 = vlaneseq
    %v2534 = vshrl.u32 %v2533, 7
    %v2535 = vlaneseq
    %v2536 = vand.u32 %v2535, 127
    %s2537 = smul.u32 0, 8
    %v2538 = vstv %s2537
    %v2539 = vadd.s32 %v2538, %v2534
    %v2540 = vmul.u32 %v2539, 4
    %v2541 = vadd.s32 %v2540, %v2536
    %vm2542 = vcmp.lt.s32.totalorder %v2541, 8
    %v2543 = vsel %vm2542, %v2532, 0.0
    %vm2544 = vcmask 31744
    %v2545 = vsel %vm2544, %v2543, 0.0
    %2546 = vadd.xlane.f32.xlu0 %v2545
    %v2547 = vpop.xlane.xlu0 %2546
    %v2548 = vrot.slane %v2547, 4
    %v2549 = vadd.f32 %v2547, %v2548
    %v2550 = vrot.slane %v2549, 2
    %v2551 = vadd.f32 %v2549, %v2550
    %v2552 = vrot.slane %v2551, 1
    %v2553 = vadd.f32 %v2551, %v2552
    %s2554 = vtos %v2553
    %v2555 = vstv %s2554
    %vm2556 = vcmask 0
    %2557 = vst.msk [vmem:[#allocation2] sm:$0x1] %vm2556, %v2555
    // Predicated region
    $region26: #{gmm_loss.1} parent=1 // pred_check
      _
    $region27: #{gmm_loss.1} parent=1 // pred_check_branch
      %2559 = sbr.rel (0) target = $region29
    $region28: #{gmm_loss.1} parent=1 // pred_region
      %2561 = vsyncadd [#allocation3], 0
      %s2563 = sshll.u32 [#allocation2], 4
      %s2564 = int_to_ptr.vmem [resolvable:$true] %s2563
      %s2565 = sshll.u32 %s6, 4
      %s2566 = int_to_ptr.hbm [resolvable:$true] %s2565
      %2568 = dma.vmem_to_hbm [thread:$0]  %s2564, 16, %s2566, [#allocation3]
    $region29: #{gmm_loss.1} parent=1 // pred_fallthru
      _
    // Predicated region
    $region30: #{gmm_loss.1} parent=1 // pred_check
      _
    $region31: #{gmm_loss.1} parent=1 // pred_check_branch
      %2570 = sbr.rel (0) target = $region33
    $region32: #{gmm_loss.1} parent=1 // pred_region
      %2572 = dma.done [#allocation3], 16
    $region33: #{gmm_loss.1} parent=1 // pred_fallthru
      _
    %2573 = vsyncpa [#allocation3], 1

</llo_original>
